<compile_context>
chip_gen: v5e
topology: v5e:2x2
jax: 0.10.0
libtpu: 0.0.40
codegen_flags: <defaults>
</compile_context>

<pallas_src>
import jax
import jax.numpy as jnp
from jax.experimental import pallas as pl
from jax.experimental.pallas import tpu as pltpu

EMBED_DIM = 768
HIDDEN_DIMS = [512, 256, 128]
NUM_CLASSES = 1093
NUM_CLASSES_PADDED = 1152   # next multiple of 128 -> lane-dense output stores
BN_EPS = 1e-5


def _mlp_kernel(x_ref,
                w1_ref, b1_ref,
                w2_ref, b2_ref,
                w3_ref, b3_ref,
                w4_ref, b4_ref,
                o_ref):
    # MXU matmuls with bf16 operands, f32 accumulation; bias + ReLU in f32 on VPU.
    h = jnp.dot(x_ref[...], w1_ref[...], preferred_element_type=jnp.float32) + b1_ref[...]
    h = jnp.maximum(h, 0.0).astype(jnp.bfloat16)

    h = jnp.dot(h, w2_ref[...], preferred_element_type=jnp.float32) + b2_ref[...]
    h = jnp.maximum(h, 0.0).astype(jnp.bfloat16)

    h = jnp.dot(h, w3_ref[...], preferred_element_type=jnp.float32) + b3_ref[...]
    h = jnp.maximum(h, 0.0).astype(jnp.bfloat16)

    out = jnp.dot(h, w4_ref[...], preferred_element_type=jnp.float32) + b4_ref[...]
    o_ref[...] = out.astype(o_ref.dtype)


def geographical_classifier_forward(x, kernel_params, *, tile_b=512):
    """x: (B, EMBED_DIM) float32 -> (B, NUM_CLASSES) float32."""
    B = x.shape[0]

    # Batch tile: multiple of 8 (sublane), capped at tile_b. Pad B up to a multiple.
    tb = min(tile_b, max(8, ((B + 7) // 8) * 8))
    b_pad = ((B + tb - 1) // tb) * tb

    x = x.astype(jnp.bfloat16)
    if b_pad != B:
        x = jnp.pad(x, ((0, b_pad - B), (0, 0)))

    grid = (b_pad // tb,)

    def resident(a):
        # constant block index -> fetched once, stays VMEM-resident across the grid
        return pl.BlockSpec(a.shape, lambda i: (0, 0))

    (w1, b1, w2, b2, w3, b3, w4, b4) = kernel_params
    in_specs = [
        pl.BlockSpec((tb, EMBED_DIM), lambda i: (i, 0)),
        resident(w1), resident(b1),
        resident(w2), resident(b2),
        resident(w3), resident(b3),
        resident(w4), resident(b4),
    ]
    out_spec = pl.BlockSpec((tb, NUM_CLASSES_PADDED), lambda i: (i, 0))

    out = pl.pallas_call(
        _mlp_kernel,
        out_shape=jax.ShapeDtypeStruct((b_pad, NUM_CLASSES_PADDED), jnp.float32),
        grid=grid,
        in_specs=in_specs,
        out_specs=out_spec,
        compiler_params=pltpu.CompilerParams(
            dimension_semantics=("parallel",),
            vmem_limit_bytes=32 << 20,
        ),
    )(x, *kernel_params)

    return out[:B, :NUM_CLASSES]


def init_params(key):
    """Raw PyTorch-style parameters: per block (W, b, gamma, beta, run_mean, run_var)."""
    dims = [EMBED_DIM] + HIDDEN_DIMS
    blocks = []
    for d_in, d_out in zip(dims[:-1], dims[1:]):
        key, k1, k2, k3, k4, k5, k6 = jax.random.split(key, 7)
        w = jax.random.normal(k1, (d_in, d_out), jnp.float32) * 0.02
        b = jax.random.normal(k2, (1, d_out), jnp.float32) * 0.02
        gamma = 1.0 + 0.1 * jax.random.normal(k3, (1, d_out), jnp.float32)
        beta = 0.1 * jax.random.normal(k4, (1, d_out), jnp.float32)
        run_mean = 0.1 * jax.random.normal(k5, (1, d_out), jnp.float32)
        run_var = jax.random.uniform(k6, (1, d_out), jnp.float32, minval=0.5, maxval=1.5)
        blocks.append((w, b, gamma, beta, run_mean, run_var))
    key, k1, k2 = jax.random.split(key, 3)
    w_out = jax.random.normal(k1, (HIDDEN_DIMS[-1], NUM_CLASSES), jnp.float32) * 0.02
    b_out = jax.random.normal(k2, (1, NUM_CLASSES), jnp.float32) * 0.02
    return blocks, (w_out, b_out)


def fold_params(blocks, out_layer):
    """Host-side prep: fold eval-mode BN affine (scale s, shift t) into the NEXT
    Linear ((h*s + t) @ W + b == h @ (diag(s) W) + (t @ W + b)), pad the class dim
    to 1152, and cast weights to bf16 (biases stay f32)."""
    kp = []
    carry_s = None  # (1, d_in)
    carry_t = None  # (1, d_in)
    for (w, b, gamma, beta, mean, var) in blocks:
        if carry_s is not None:
            b = b + carry_t @ w
            w = w * carry_s.reshape(-1, 1)
        kp += [w.astype(jnp.bfloat16), b.astype(jnp.float32)]
        s = gamma / jnp.sqrt(var + BN_EPS)
        t = beta - mean * s
        carry_s, carry_t = s, t

    w_out, b_out = out_layer
    b_out = b_out + carry_t @ w_out
    w_out = w_out * carry_s.reshape(-1, 1)
    pad = NUM_CLASSES_PADDED - NUM_CLASSES
    w_out = jnp.pad(w_out, ((0, 0), (0, pad)))
    b_out = jnp.pad(b_out, ((0, 0), (0, pad)))
    kp += [w_out.astype(jnp.bfloat16), b_out.astype(jnp.float32)]
    return tuple(kp)


def reference_forward(x, blocks, out_layer):
    """Exact f32 eval-mode reference of the PyTorch module."""
    h = x
    for (w, b, gamma, beta, mean, var) in blocks:
        h = jnp.maximum(jnp.dot(h, w, precision=jax.lax.Precision.HIGHEST) + b, 0.0)
        s = gamma / jnp.sqrt(var + BN_EPS)
        h = h * s + (beta - mean * s)   # Dropout: identity in eval mode
    w_out, b_out = out_layer
    return jnp.dot(h, w_out, precision=jax.lax.Precision.HIGHEST) + b_out


def reference_forward_bf16(x, kernel_params):
    """Precision-matched reference: bf16-rounded matmul operands, f32 accumulate."""
    (w1, b1, w2, b2, w3, b3, w4, b4) = [a.astype(jnp.float32) for a in kernel_params]

    def dot(a, w):
        a = a.astype(jnp.bfloat16).astype(jnp.float32)
        return jnp.dot(a, w, precision=jax.lax.Precision.HIGHEST)

    h = jnp.maximum(dot(x, w1) + b1, 0.0)
    h = jnp.maximum(dot(h, w2) + b2, 0.0)
    h = jnp.maximum(dot(h, w3) + b3, 0.0)
    return (dot(h, w4) + b4)[:, :NUM_CLASSES]


if __name__ == "__main__":
    key = jax.random.PRNGKey(0)
    k_x, k_p = jax.random.split(key)
    B = 8
    x = jax.random.normal(k_x, (B, EMBED_DIM), jnp.float32)

    blocks, out_layer = init_params(k_p)
    kernel_params = fold_params(blocks, out_layer)

    out = geographical_classifier_forward(x, kernel_params)
    out = jax.block_until_ready(out)
    assert out.shape == (B, NUM_CLASSES)

    # Precision-matched check (same bf16 operand rounding as the kernel).
    ref_emu = reference_forward_bf16(x, kernel_params)
    assert jnp.allclose(out, ref_emu, atol=2e-3, rtol=2e-3)

    # Loose sanity check vs exact f32 eval-mode semantics of the PyTorch module.
    ref_f32 = reference_forward(x, blocks, out_layer)
    assert jnp.allclose(out, ref_f32, atol=5e-2, rtol=5e-2)

    print("KERNEL_OK")
</pallas_src>

<mosaic_0001>
module attributes {stable_mosaic.version = 11 : i64} {
  func.func @_mlp_kernel(%arg0: i32, %arg1: memref<8x768xbf16, #tpu.memory_space<vmem>>, %arg2: memref<768x512xbf16, #tpu.memory_space<vmem>>, %arg3: memref<1x512xf32, #tpu.memory_space<vmem>>, %arg4: memref<512x256xbf16, #tpu.memory_space<vmem>>, %arg5: memref<1x256xf32, #tpu.memory_space<vmem>>, %arg6: memref<256x128xbf16, #tpu.memory_space<vmem>>, %arg7: memref<1x128xf32, #tpu.memory_space<vmem>>, %arg8: memref<128x1152xbf16, #tpu.memory_space<vmem>>, %arg9: memref<1x1152xf32, #tpu.memory_space<vmem>>, %arg10: memref<8x1152xf32, #tpu.memory_space<vmem>>) attributes {dimension_semantics = [#tpu.dimension_semantics<parallel>], iteration_bounds = array<i64: 1>, scalar_prefetch = 0 : i64, scratch_operands = 0 : i64, tpu.core_type = #tpu.core_type<tc>, window_params = [{transform_indices = @transform_0, window_bounds = array<i64: 8, 768>}, {pipeline_mode = #tpu.pipeline_mode<synchronous>, transform_indices = @transform_1, window_bounds = array<i64: 768, 512>}, {pipeline_mode = #tpu.pipeline_mode<synchronous>, transform_indices = @transform_2, window_bounds = array<i64: 1, 512>}, {pipeline_mode = #tpu.pipeline_mode<synchronous>, transform_indices = @transform_3, window_bounds = array<i64: 512, 256>}, {pipeline_mode = #tpu.pipeline_mode<synchronous>, transform_indices = @transform_4, window_bounds = array<i64: 1, 256>}, {pipeline_mode = #tpu.pipeline_mode<synchronous>, transform_indices = @transform_5, window_bounds = array<i64: 256, 128>}, {pipeline_mode = #tpu.pipeline_mode<synchronous>, transform_indices = @transform_6, window_bounds = array<i64: 1, 128>}, {pipeline_mode = #tpu.pipeline_mode<synchronous>, transform_indices = @transform_7, window_bounds = array<i64: 128, 1152>}, {pipeline_mode = #tpu.pipeline_mode<synchronous>, transform_indices = @transform_8, window_bounds = array<i64: 1, 1152>}, {transform_indices = @transform_9, window_bounds = array<i64: 8, 1152>}]} {
    %c0 = arith.constant 0 : index
    %c0_0 = arith.constant 0 : index
    %0 = vector.load %arg1[%c0, %c0_0] : memref<8x768xbf16, #tpu.memory_space<vmem>>, vector<8x768xbf16>
    %c0_1 = arith.constant 0 : index
    %c0_2 = arith.constant 0 : index
    %1 = vector.load %arg2[%c0_1, %c0_2] : memref<768x512xbf16, #tpu.memory_space<vmem>>, vector<768x512xbf16>
    %cst = arith.constant dense<0.000000e+00> : vector<8x512xf32>
    %2 = tpu.matmul %0, %1, %cst {dimension_numbers = #tpu.dot_dimension_numbers<[1], [0], [0], [1], [0, 0, 1, 1], [], []>} : vector<8x768xbf16>, vector<768x512xbf16>, vector<8x512xf32> -> vector<8x512xf32>
    %c0_3 = arith.constant 0 : index
    %c0_4 = arith.constant 0 : index
    %3 = vector.load %arg3[%c0_3, %c0_4] : memref<1x512xf32, #tpu.memory_space<vmem>>, vector<1x512xf32>
    %4 = vector.broadcast %3 : vector<1x512xf32> to vector<8x512xf32>
    %5 = arith.addf %2, %4 : vector<8x512xf32>
    %cst_5 = arith.constant 0.000000e+00 : f32
    %6 = vector.broadcast %cst_5 : f32 to vector<8x512xf32>
    %7 = arith.maximumf %5, %6 : vector<8x512xf32>
    %8 = arith.truncf %7 : vector<8x512xf32> to vector<8x512xbf16>
    %c0_6 = arith.constant 0 : index
    %c0_7 = arith.constant 0 : index
    %9 = vector.load %arg4[%c0_6, %c0_7] : memref<512x256xbf16, #tpu.memory_space<vmem>>, vector<512x256xbf16>
    %cst_8 = arith.constant dense<0.000000e+00> : vector<8x256xf32>
    %10 = tpu.matmul %8, %9, %cst_8 {dimension_numbers = #tpu.dot_dimension_numbers<[1], [0], [0], [1], [0, 0, 1, 1], [], []>} : vector<8x512xbf16>, vector<512x256xbf16>, vector<8x256xf32> -> vector<8x256xf32>
    %c0_9 = arith.constant 0 : index
    %c0_10 = arith.constant 0 : index
    %11 = vector.load %arg5[%c0_9, %c0_10] : memref<1x256xf32, #tpu.memory_space<vmem>>, vector<1x256xf32>
    %12 = vector.broadcast %11 : vector<1x256xf32> to vector<8x256xf32>
    %13 = arith.addf %10, %12 : vector<8x256xf32>
    %cst_11 = arith.constant 0.000000e+00 : f32
    %14 = vector.broadcast %cst_11 : f32 to vector<8x256xf32>
    %15 = arith.maximumf %13, %14 : vector<8x256xf32>
    %16 = arith.truncf %15 : vector<8x256xf32> to vector<8x256xbf16>
    %c0_12 = arith.constant 0 : index
    %c0_13 = arith.constant 0 : index
    %17 = vector.load %arg6[%c0_12, %c0_13] : memref<256x128xbf16, #tpu.memory_space<vmem>>, vector<256x128xbf16>
    %cst_14 = arith.constant dense<0.000000e+00> : vector<8x128xf32>
    %18 = tpu.matmul %16, %17, %cst_14 {dimension_numbers = #tpu.dot_dimension_numbers<[1], [0], [0], [1], [0, 0, 1, 1], [], []>} : vector<8x256xbf16>, vector<256x128xbf16>, vector<8x128xf32> -> vector<8x128xf32>
    %c0_15 = arith.constant 0 : index
    %c0_16 = arith.constant 0 : index
    %19 = vector.load %arg7[%c0_15, %c0_16] : memref<1x128xf32, #tpu.memory_space<vmem>>, vector<1x128xf32>
    %20 = vector.broadcast %19 : vector<1x128xf32> to vector<8x128xf32>
    %21 = arith.addf %18, %20 : vector<8x128xf32>
    %cst_17 = arith.constant 0.000000e+00 : f32
    %22 = vector.broadcast %cst_17 : f32 to vector<8x128xf32>
    %23 = arith.maximumf %21, %22 : vector<8x128xf32>
    %24 = arith.truncf %23 : vector<8x128xf32> to vector<8x128xbf16>
    %c0_18 = arith.constant 0 : index
    %c0_19 = arith.constant 0 : index
    %25 = vector.load %arg8[%c0_18, %c0_19] : memref<128x1152xbf16, #tpu.memory_space<vmem>>, vector<128x1152xbf16>
    %cst_20 = arith.constant dense<0.000000e+00> : vector<8x1152xf32>
    %26 = tpu.matmul %24, %25, %cst_20 {dimension_numbers = #tpu.dot_dimension_numbers<[1], [0], [0], [1], [0, 0, 1, 1], [], []>} : vector<8x128xbf16>, vector<128x1152xbf16>, vector<8x1152xf32> -> vector<8x1152xf32>
    %c0_21 = arith.constant 0 : index
    %c0_22 = arith.constant 0 : index
    %27 = vector.load %arg9[%c0_21, %c0_22] : memref<1x1152xf32, #tpu.memory_space<vmem>>, vector<1x1152xf32>
    %28 = vector.broadcast %27 : vector<1x1152xf32> to vector<8x1152xf32>
    %29 = arith.addf %26, %28 : vector<8x1152xf32>
    %c0_23 = arith.constant 0 : index
    %c0_24 = arith.constant 0 : index
    %30 = vector.load %arg10[%c0_23, %c0_24] : memref<8x1152xf32, #tpu.memory_space<vmem>>, vector<8x1152xf32>
    tpu.vector_store %arg10[%c0_23, %c0_24], %29 {strides = array<i32>} : memref<8x1152xf32, #tpu.memory_space<vmem>>, vector<8x1152xf32>,
    return
  }
  func.func @transform_0(%arg0: i32) -> (i32, i32) {
    %c0_i32 = arith.constant 0 : i32
    %c0_i32_0 = arith.constant 0 : i32
    return %arg0, %c0_i32 : i32, i32
  }
  func.func @transform_1(%arg0: i32) -> (i32, i32) {
    %c0_i32 = arith.constant 0 : i32
    %c0_i32_0 = arith.constant 0 : i32
    %c0_i32_1 = arith.constant 0 : i32
    return %c0_i32, %c0_i32_0 : i32, i32
  }
  func.func @transform_2(%arg0: i32) -> (i32, i32) {
    %c0_i32 = arith.constant 0 : i32
    %c0_i32_0 = arith.constant 0 : i32
    %c0_i32_1 = arith.constant 0 : i32
    return %c0_i32, %c0_i32_0 : i32, i32
  }
  func.func @transform_3(%arg0: i32) -> (i32, i32) {
    %c0_i32 = arith.constant 0 : i32
    %c0_i32_0 = arith.constant 0 : i32
    %c0_i32_1 = arith.constant 0 : i32
    return %c0_i32, %c0_i32_0 : i32, i32
  }
  func.func @transform_4(%arg0: i32) -> (i32, i32) {
    %c0_i32 = arith.constant 0 : i32
    %c0_i32_0 = arith.constant 0 : i32
    %c0_i32_1 = arith.constant 0 : i32
    return %c0_i32, %c0_i32_0 : i32, i32
  }
  func.func @transform_5(%arg0: i32) -> (i32, i32) {
    %c0_i32 = arith.constant 0 : i32
    %c0_i32_0 = arith.constant 0 : i32
    %c0_i32_1 = arith.constant 0 : i32
    return %c0_i32, %c0_i32_0 : i32, i32
  }
  func.func @transform_6(%arg0: i32) -> (i32, i32) {
    %c0_i32 = arith.constant 0 : i32
    %c0_i32_0 = arith.constant 0 : i32
    %c0_i32_1 = arith.constant 0 : i32
    return %c0_i32, %c0_i32_0 : i32, i32
  }
  func.func @transform_7(%arg0: i32) -> (i32, i32) {
    %c0_i32 = arith.constant 0 : i32
    %c0_i32_0 = arith.constant 0 : i32
    %c0_i32_1 = arith.constant 0 : i32
    return %c0_i32, %c0_i32_0 : i32, i32
  }
  func.func @transform_8(%arg0: i32) -> (i32, i32) {
    %c0_i32 = arith.constant 0 : i32
    %c0_i32_0 = arith.constant 0 : i32
    %c0_i32_1 = arith.constant 0 : i32
    return %c0_i32, %c0_i32_0 : i32, i32
  }
  func.func @transform_9(%arg0: i32) -> (i32, i32) {
    %c0_i32 = arith.constant 0 : i32
    %c0_i32_0 = arith.constant 0 : i32
    return %arg0, %c0_i32 : i32, i32
  }
}

</mosaic_0001>

<llo_original>
// kernel: tpu_custom_call.1
$region0: #{tpu_custom_call.1}
  #allocation0 [shape = 'u32[]', space=smem, size = 0x4, offset = 0x4, fixed_abs, tag = 'smem constant byte address 0x4 - core index']
  #allocation1 [shape = 'u32[72,128]{1,0:T(1,128)}', space=vmem, size = 0x9000, scoped, tag = 'internal scratch']
  %s0 = inlined_call_operand.hbm [shape: bf16[8,768], index: 0, kind: input, shape index: {}]
  %s1 = inlined_call_operand.hbm [shape: bf16[768,512], index: 1, kind: input, shape index: {}]
  %s2 = inlined_call_operand.hbm [shape: f32[1,512], index: 2, kind: input, shape index: {}]
  %s3 = inlined_call_operand.hbm [shape: bf16[512,256], index: 3, kind: input, shape index: {}]
  %s4 = inlined_call_operand.vmem [shape: f32[1,256], index: 4, kind: input, shape index: {}]
  %s5 = inlined_call_operand.hbm [shape: bf16[256,128], index: 5, kind: input, shape index: {}]
  %s6 = inlined_call_operand.vmem [shape: f32[1,128], index: 6, kind: input, shape index: {}]
  %s7 = inlined_call_operand.hbm [shape: bf16[128,1152], index: 7, kind: input, shape index: {}]
  %s8 = inlined_call_operand.hbm [shape: f32[1,1152], index: 8, kind: input, shape index: {}]
  %s9 = inlined_call_operand.hbm [shape: f32[8,1152], index: 9, kind: output, shape index: {}]
  %s10 = sld [smem:[#allocation0]]
  $region74: #{tpu_custom_call.1} parent=0
    _
  %s12 = ssub.s32 1, %s10
  %s13 = scalar_select 0, %s12, %s10
  $region1: #{tpu_custom_call.1} parent=0
    #allocation2 [shape = 'u8[12288]{0}', space=vmem, size = 0x3000, scoped, tag = 'input window, operand 0, single buffered']
    #allocation3 [shape = 's32[1]{0}', space=sflag, size = 0x4, scoped, tag = 'scoped memory for tpu_custom_call.1']
    #allocation4 [shape = 's32[1]{0}', space=sflag, size = 0x4, scoped, tag = 'scoped memory for tpu_custom_call.1']
    #allocation5 [shape = 'u8[786432]{0}', space=vmem, size = 0xc0000, scoped, tag = 'input window, operand 1, single buffered']
    #allocation6 [shape = 's32[1]{0}', space=sflag, size = 0x4, scoped, tag = 'scoped memory for tpu_custom_call.1']
    #allocation7 [shape = 'u8[2048]{0}', space=vmem, size = 0x800, scoped, tag = 'input window, operand 2, single buffered']
    #allocation8 [shape = 'u8[262144]{0}', space=vmem, size = 0x40000, scoped, tag = 'input window, operand 3, single buffered']
    #allocation9 [shape = 's32[1]{0}', space=sflag, size = 0x4, scoped, tag = 'scoped memory for tpu_custom_call.1']
    #allocation10 [shape = 'u8[65536]{0}', space=vmem, size = 0x10000, scoped, tag = 'input window, operand 5, single buffered']
    #allocation11 [shape = 'u8[294912]{0}', space=vmem, size = 0x48000, scoped, tag = 'input window, operand 7, single buffered']
    #allocation12 [shape = 's32[1]{0}', space=sflag, size = 0x4, scoped, tag = 'scoped memory for tpu_custom_call.1']
    #allocation13 [shape = 'u8[4608]{0}', space=vmem, size = 0x1400, scoped, tag = 'input window, operand 8, single buffered']
    #allocation14 [shape = 'u8[36864]{0}', space=vmem, size = 0x9000, scoped, tag = 'output window, operand 0, single buffered']
    %14 = vsyncpa [#allocation3], 0
    %15 = vsyncpa [#allocation6], 0
    %16 = vsyncpa [#allocation9], 0
    %17 = vsyncpa [#allocation12], 0
    %18 = vsyncpa [#allocation4], 0
    // Predicated region
    $region2: #{tpu_custom_call.1} parent=1 // pred_check
      _
    $region3: #{tpu_custom_call.1} parent=1 // pred_check_branch
      %20 = sbr.rel (0) target = $region5
    $region4: #{tpu_custom_call.1} parent=1 // pred_region
      %22 = vsyncadd [#allocation3], 0
      %s24 = sshll.u32 %s0, 4
      %s25 = int_to_ptr.hbm [resolvable:$true] %s24
      %s26 = sshll.u32 [#allocation2], 4
      %s27 = int_to_ptr.vmem [resolvable:$true] %s26
      %29 = dma.hbm_to_vmem [thread:$0]  %s25, 384, %s27, [#allocation3]
    $region5: #{tpu_custom_call.1} parent=1 // pred_fallthru
      _
    // Predicated region
    $region6: #{tpu_custom_call.1} parent=1 // pred_check
      _
    $region7: #{tpu_custom_call.1} parent=1 // pred_check_branch
      %31 = sbr.rel (0) target = $region9
    $region8: #{tpu_custom_call.1} parent=1 // pred_region
      %33 = vsyncadd [#allocation6], 0
      %s34 = sshll.u32 %s1, 4
      %s35 = int_to_ptr.hbm [resolvable:$true] %s34
      %s36 = sshll.u32 [#allocation5], 4
      %s37 = int_to_ptr.vmem [resolvable:$true] %s36
      %42 = dma.hbm_to_vmem [thread:$0]  %s35, 24576, %s37, [#allocation6], 256, 256, 16
    $region9: #{tpu_custom_call.1} parent=1 // pred_fallthru
      _
    // Predicated region
    $region10: #{tpu_custom_call.1} parent=1 // pred_check
      _
    $region11: #{tpu_custom_call.1} parent=1 // pred_check_branch
      %44 = sbr.rel (0) target = $region13
    $region12: #{tpu_custom_call.1} parent=1 // pred_region
      %46 = vsyncadd [#allocation6], 0
      %s48 = sshll.u32 %s2, 4
      %s49 = int_to_ptr.hbm [resolvable:$true] %s48
      %s50 = sshll.u32 [#allocation7], 4
      %s51 = int_to_ptr.vmem [resolvable:$true] %s50
      %53 = dma.hbm_to_vmem [thread:$0]  %s49, 64, %s51, [#allocation6]
    $region13: #{tpu_custom_call.1} parent=1 // pred_fallthru
      _
    // Predicated region
    $region14: #{tpu_custom_call.1} parent=1 // pred_check
      _
    $region15: #{tpu_custom_call.1} parent=1 // pred_check_branch
      %55 = sbr.rel (0) target = $region17
    $region16: #{tpu_custom_call.1} parent=1 // pred_region
      %57 = vsyncadd [#allocation9], 0
      %s58 = sshll.u32 %s3, 4
      %s59 = int_to_ptr.hbm [resolvable:$true] %s58
      %s60 = sshll.u32 [#allocation8], 4
      %s61 = int_to_ptr.vmem [resolvable:$true] %s60
      %66 = dma.hbm_to_vmem [thread:$0]  %s59, 8192, %s61, [#allocation9], 128, 128, 8
    $region17: #{tpu_custom_call.1} parent=1 // pred_fallthru
      _
    // Predicated region
    $region18: #{tpu_custom_call.1} parent=1 // pred_check
      _
    $region19: #{tpu_custom_call.1} parent=1 // pred_check_branch
      %68 = sbr.rel (0) target = $region21
    $region20: #{tpu_custom_call.1} parent=1 // pred_region
      _
    $region21: #{tpu_custom_call.1} parent=1 // pred_fallthru
      _
    // Predicated region
    $region22: #{tpu_custom_call.1} parent=1 // pred_check
      _
    $region23: #{tpu_custom_call.1} parent=1 // pred_check_branch
      %70 = sbr.rel (0) target = $region25
    $region24: #{tpu_custom_call.1} parent=1 // pred_region
      %72 = vsyncadd [#allocation9], 0
      %s73 = sshll.u32 %s5, 4
      %s74 = int_to_ptr.hbm [resolvable:$true] %s73
      %s75 = sshll.u32 [#allocation10], 4
      %s76 = int_to_ptr.vmem [resolvable:$true] %s75
      %81 = dma.hbm_to_vmem [thread:$0]  %s74, 2048, %s76, [#allocation9], 64, 64, 4
    $region25: #{tpu_custom_call.1} parent=1 // pred_fallthru
      _
    // Predicated region
    $region26: #{tpu_custom_call.1} parent=1 // pred_check
      _
    $region27: #{tpu_custom_call.1} parent=1 // pred_check_branch
      %83 = sbr.rel (0) target = $region29
    $region28: #{tpu_custom_call.1} parent=1 // pred_region
      _
    $region29: #{tpu_custom_call.1} parent=1 // pred_fallthru
      _
    // Predicated region
    $region30: #{tpu_custom_call.1} parent=1 // pred_check
      _
    $region31: #{tpu_custom_call.1} parent=1 // pred_check_branch
      %85 = sbr.rel (0) target = $region33
    $region32: #{tpu_custom_call.1} parent=1 // pred_region
      %87 = vsyncadd [#allocation12], 0
      %s88 = sshll.u32 %s7, 4
      %s89 = int_to_ptr.hbm [resolvable:$true] %s88
      %s90 = sshll.u32 [#allocation11], 4
      %s91 = int_to_ptr.vmem [resolvable:$true] %s90
      %96 = dma.hbm_to_vmem [thread:$0]  %s89, 9216, %s91, [#allocation12], 576, 576, 36
    $region33: #{tpu_custom_call.1} parent=1 // pred_fallthru
      _
    // Predicated region
    $region34: #{tpu_custom_call.1} parent=1 // pred_check
      _
    $region35: #{tpu_custom_call.1} parent=1 // pred_check_branch
      %98 = sbr.rel (0) target = $region37
    $region36: #{tpu_custom_call.1} parent=1 // pred_region
      %100 = vsyncadd [#allocation12], 0
      %s102 = sshll.u32 %s8, 4
      %s103 = int_to_ptr.hbm [resolvable:$true] %s102
      %s104 = sshll.u32 [#allocation13], 4
      %s105 = int_to_ptr.vmem [resolvable:$true] %s104
      %107 = dma.hbm_to_vmem [thread:$0]  %s103, 144, %s105, [#allocation12]
    $region37: #{tpu_custom_call.1} parent=1 // pred_fallthru
      _
    // Predicated region
    $region38: #{tpu_custom_call.1} parent=1 // pred_check
      _
    $region39: #{tpu_custom_call.1} parent=1 // pred_check_branch
      %109 = sbr.rel (0) target = $region41
    $region40: #{tpu_custom_call.1} parent=1 // pred_region
      %111 = dma.done [#allocation3], 384
    $region41: #{tpu_custom_call.1} parent=1 // pred_fallthru
      _
    // Predicated region
    $region42: #{tpu_custom_call.1} parent=1 // pred_check
      _
    $region43: #{tpu_custom_call.1} parent=1 // pred_check_branch
      %113 = sbr.rel (0) target = $region45
    $region44: #{tpu_custom_call.1} parent=1 // pred_region
      %115 = dma.done [#allocation6], 24576
    $region45: #{tpu_custom_call.1} parent=1 // pred_fallthru
      _
    // Predicated region
    $region46: #{tpu_custom_call.1} parent=1 // pred_check
      _
    $region47: #{tpu_custom_call.1} parent=1 // pred_check_branch
      %117 = sbr.rel (0) target = $region49
    $region48: #{tpu_custom_call.1} parent=1 // pred_region
      %119 = dma.done [#allocation6], 64
    $region49: #{tpu_custom_call.1} parent=1 // pred_fallthru
      _
    // Predicated region
    $region50: #{tpu_custom_call.1} parent=1 // pred_check
      _
    $region51: #{tpu_custom_call.1} parent=1 // pred_check_branch
      %121 = sbr.rel (0) target = $region53
    $region52: #{tpu_custom_call.1} parent=1 // pred_region
      %123 = dma.done [#allocation9], 8192
    $region53: #{tpu_custom_call.1} parent=1 // pred_fallthru
      _
    // Predicated region
    $region54: #{tpu_custom_call.1} parent=1 // pred_check
      _
    $region55: #{tpu_custom_call.1} parent=1 // pred_check_branch
      %125 = sbr.rel (0) target = $region57
    $region56: #{tpu_custom_call.1} parent=1 // pred_region
      %127 = dma.done [#allocation9], 2048
    $region57: #{tpu_custom_call.1} parent=1 // pred_fallthru
      _
    // Predicated region
    $region58: #{tpu_custom_call.1} parent=1 // pred_check
      _
    $region59: #{tpu_custom_call.1} parent=1 // pred_check_branch
      %129 = sbr.rel (0) target = $region61
    $region60: #{tpu_custom_call.1} parent=1 // pred_region
      %131 = dma.done [#allocation12], 9216
    $region61: #{tpu_custom_call.1} parent=1 // pred_fallthru
      _
    // Predicated region
    $region62: #{tpu_custom_call.1} parent=1 // pred_check
      _
    $region63: #{tpu_custom_call.1} parent=1 // pred_check_branch
      %133 = sbr.rel (0) target = $region65
    $region64: #{tpu_custom_call.1} parent=1 // pred_region
      %135 = dma.done [#allocation12], 144
    $region65: #{tpu_custom_call.1} parent=1 // pred_fallthru
      _
    %v136 = vld [vmem:[#allocation2] sm:$0xff]
    %v137 = vld [vmem:[#allocation2 + $0x8] sm:$0xff]
    %v138 = vld [vmem:[#allocation2 + $0x10] sm:$0xff]
    %v139 = vld [vmem:[#allocation5] sm:$0xff]
    %v140 = vld [vmem:[#allocation5 + $0x8] sm:$0xff]
    %v141 = vld [vmem:[#allocation5 + $0x10] sm:$0xff]
    %v142 = vld [vmem:[#allocation5 + $0x18] sm:$0xff]
    %v143 = vld [vmem:[#allocation5 + $0x20] sm:$0xff]
    %v144 = vld [vmem:[#allocation5 + $0x28] sm:$0xff]
    %v145 = vld [vmem:[#allocation5 + $0x30] sm:$0xff]
    %v146 = vld [vmem:[#allocation5 + $0x38] sm:$0xff]
    %v147 = vld [vmem:[#allocation5 + $0x40] sm:$0xff]
    %v148 = vld [vmem:[#allocation5 + $0x48] sm:$0xff]
    %v149 = vld [vmem:[#allocation5 + $0x50] sm:$0xff]
    %v150 = vld [vmem:[#allocation5 + $0x58] sm:$0xff]
    %v151 = vld [vmem:[#allocation5 + $0x60] sm:$0xff]
    %v152 = vld [vmem:[#allocation5 + $0x68] sm:$0xff]
    %v153 = vld [vmem:[#allocation5 + $0x70] sm:$0xff]
    %v154 = vld [vmem:[#allocation5 + $0x78] sm:$0xff]
    %v155 = vld [vmem:[#allocation5 + $0x80] sm:$0xff]
    %v156 = vld [vmem:[#allocation5 + $0x88] sm:$0xff]
    %v157 = vld [vmem:[#allocation5 + $0x90] sm:$0xff]
    %v158 = vld [vmem:[#allocation5 + $0x98] sm:$0xff]
    %v159 = vld [vmem:[#allocation5 + $0xa0] sm:$0xff]
    %v160 = vld [vmem:[#allocation5 + $0xa8] sm:$0xff]
    %v161 = vld [vmem:[#allocation5 + $0xb0] sm:$0xff]
    %v162 = vld [vmem:[#allocation5 + $0xb8] sm:$0xff]
    %v163 = vld [vmem:[#allocation5 + $0xc0] sm:$0xff]
    %v164 = vld [vmem:[#allocation5 + $0xc8] sm:$0xff]
    %v165 = vld [vmem:[#allocation5 + $0xd0] sm:$0xff]
    %v166 = vld [vmem:[#allocation5 + $0xd8] sm:$0xff]
    %v167 = vld [vmem:[#allocation5 + $0xe0] sm:$0xff]
    %v168 = vld [vmem:[#allocation5 + $0xe8] sm:$0xff]
    %v169 = vld [vmem:[#allocation5 + $0xf0] sm:$0xff]
    %v170 = vld [vmem:[#allocation5 + $0xf8] sm:$0xff]
    %v171 = vld [vmem:[#allocation5 + $0x100] sm:$0xff]
    %v172 = vld [vmem:[#allocation5 + $0x108] sm:$0xff]
    %v173 = vld [vmem:[#allocation5 + $0x110] sm:$0xff]
    %v174 = vld [vmem:[#allocation5 + $0x118] sm:$0xff]
    %v175 = vld [vmem:[#allocation5 + $0x120] sm:$0xff]
    %v176 = vld [vmem:[#allocation5 + $0x128] sm:$0xff]
    %v177 = vld [vmem:[#allocation5 + $0x130] sm:$0xff]
    %v178 = vld [vmem:[#allocation5 + $0x138] sm:$0xff]
    %v179 = vld [vmem:[#allocation5 + $0x140] sm:$0xff]
    %v180 = vld [vmem:[#allocation5 + $0x148] sm:$0xff]
    %v181 = vld [vmem:[#allocation5 + $0x150] sm:$0xff]
    %v182 = vld [vmem:[#allocation5 + $0x158] sm:$0xff]
    %v183 = vld [vmem:[#allocation5 + $0x160] sm:$0xff]
    %v184 = vld [vmem:[#allocation5 + $0x168] sm:$0xff]
    %v185 = vld [vmem:[#allocation5 + $0x170] sm:$0xff]
    %v186 = vld [vmem:[#allocation5 + $0x178] sm:$0xff]
    %v187 = vld [vmem:[#allocation5 + $0x180] sm:$0xff]
    %v188 = vld [vmem:[#allocation5 + $0x188] sm:$0xff]
    %v189 = vld [vmem:[#allocation5 + $0x190] sm:$0xff]
    %v190 = vld [vmem:[#allocation5 + $0x198] sm:$0xff]
    %v191 = vld [vmem:[#allocation5 + $0x1a0] sm:$0xff]
    %v192 = vld [vmem:[#allocation5 + $0x1a8] sm:$0xff]
    %v193 = vld [vmem:[#allocation5 + $0x1b0] sm:$0xff]
    %v194 = vld [vmem:[#allocation5 + $0x1b8] sm:$0xff]
    %v195 = vld [vmem:[#allocation5 + $0x1c0] sm:$0xff]
    %v196 = vld [vmem:[#allocation5 + $0x1c8] sm:$0xff]
    %v197 = vld [vmem:[#allocation5 + $0x1d0] sm:$0xff]
    %v198 = vld [vmem:[#allocation5 + $0x1d8] sm:$0xff]
    %v199 = vld [vmem:[#allocation5 + $0x1e0] sm:$0xff]
    %v200 = vld [vmem:[#allocation5 + $0x1e8] sm:$0xff]
    %v201 = vld [vmem:[#allocation5 + $0x1f0] sm:$0xff]
    %v202 = vld [vmem:[#allocation5 + $0x1f8] sm:$0xff]
    %v203 = vld [vmem:[#allocation5 + $0x200] sm:$0xff]
    %v204 = vld [vmem:[#allocation5 + $0x208] sm:$0xff]
    %v205 = vld [vmem:[#allocation5 + $0x210] sm:$0xff]
    %v206 = vld [vmem:[#allocation5 + $0x218] sm:$0xff]
    %v207 = vld [vmem:[#allocation5 + $0x220] sm:$0xff]
    %v208 = vld [vmem:[#allocation5 + $0x228] sm:$0xff]
    %v209 = vld [vmem:[#allocation5 + $0x230] sm:$0xff]
    %v210 = vld [vmem:[#allocation5 + $0x238] sm:$0xff]
    %v211 = vld [vmem:[#allocation5 + $0x240] sm:$0xff]
    %v212 = vld [vmem:[#allocation5 + $0x248] sm:$0xff]
    %v213 = vld [vmem:[#allocation5 + $0x250] sm:$0xff]
    %v214 = vld [vmem:[#allocation5 + $0x258] sm:$0xff]
    %v215 = vld [vmem:[#allocation5 + $0x260] sm:$0xff]
    %v216 = vld [vmem:[#allocation5 + $0x268] sm:$0xff]
    %v217 = vld [vmem:[#allocation5 + $0x270] sm:$0xff]
    %v218 = vld [vmem:[#allocation5 + $0x278] sm:$0xff]
    %v219 = vld [vmem:[#allocation5 + $0x280] sm:$0xff]
    %v220 = vld [vmem:[#allocation5 + $0x288] sm:$0xff]
    %v221 = vld [vmem:[#allocation5 + $0x290] sm:$0xff]
    %v222 = vld [vmem:[#allocation5 + $0x298] sm:$0xff]
    %v223 = vld [vmem:[#allocation5 + $0x2a0] sm:$0xff]
    %v224 = vld [vmem:[#allocation5 + $0x2a8] sm:$0xff]
    %v225 = vld [vmem:[#allocation5 + $0x2b0] sm:$0xff]
    %v226 = vld [vmem:[#allocation5 + $0x2b8] sm:$0xff]
    %v227 = vld [vmem:[#allocation5 + $0x2c0] sm:$0xff]
    %v228 = vld [vmem:[#allocation5 + $0x2c8] sm:$0xff]
    %v229 = vld [vmem:[#allocation5 + $0x2d0] sm:$0xff]
    %v230 = vld [vmem:[#allocation5 + $0x2d8] sm:$0xff]
    %v231 = vld [vmem:[#allocation5 + $0x2e0] sm:$0xff]
    %v232 = vld [vmem:[#allocation5 + $0x2e8] sm:$0xff]
    %v233 = vld [vmem:[#allocation5 + $0x2f0] sm:$0xff]
    %v234 = vld [vmem:[#allocation5 + $0x2f8] sm:$0xff]
    %v235 = vld [vmem:[#allocation5 + $0x300] sm:$0xff]
    %v236 = vld [vmem:[#allocation5 + $0x308] sm:$0xff]
    %v237 = vld [vmem:[#allocation5 + $0x310] sm:$0xff]
    %v238 = vld [vmem:[#allocation5 + $0x318] sm:$0xff]
    %v239 = vld [vmem:[#allocation5 + $0x320] sm:$0xff]
    %v240 = vld [vmem:[#allocation5 + $0x328] sm:$0xff]
    %v241 = vld [vmem:[#allocation5 + $0x330] sm:$0xff]
    %v242 = vld [vmem:[#allocation5 + $0x338] sm:$0xff]
    %v243 = vld [vmem:[#allocation5 + $0x340] sm:$0xff]
    %v244 = vld [vmem:[#allocation5 + $0x348] sm:$0xff]
    %v245 = vld [vmem:[#allocation5 + $0x350] sm:$0xff]
    %v246 = vld [vmem:[#allocation5 + $0x358] sm:$0xff]
    %v247 = vld [vmem:[#allocation5 + $0x360] sm:$0xff]
    %v248 = vld [vmem:[#allocation5 + $0x368] sm:$0xff]
    %v249 = vld [vmem:[#allocation5 + $0x370] sm:$0xff]
    %v250 = vld [vmem:[#allocation5 + $0x378] sm:$0xff]
    %v251 = vld [vmem:[#allocation5 + $0x380] sm:$0xff]
    %v252 = vld [vmem:[#allocation5 + $0x388] sm:$0xff]
    %v253 = vld [vmem:[#allocation5 + $0x390] sm:$0xff]
    %v254 = vld [vmem:[#allocation5 + $0x398] sm:$0xff]
    %v255 = vld [vmem:[#allocation5 + $0x3a0] sm:$0xff]
    %v256 = vld [vmem:[#allocation5 + $0x3a8] sm:$0xff]
    %v257 = vld [vmem:[#allocation5 + $0x3b0] sm:$0xff]
    %v258 = vld [vmem:[#allocation5 + $0x3b8] sm:$0xff]
    %v259 = vld [vmem:[#allocation5 + $0x3c0] sm:$0xff]
    %v260 = vld [vmem:[#allocation5 + $0x3c8] sm:$0xff]
    %v261 = vld [vmem:[#allocation5 + $0x3d0] sm:$0xff]
    %v262 = vld [vmem:[#allocation5 + $0x3d8] sm:$0xff]
    %v263 = vld [vmem:[#allocation5 + $0x3e0] sm:$0xff]
    %v264 = vld [vmem:[#allocation5 + $0x3e8] sm:$0xff]
    %v265 = vld [vmem:[#allocation5 + $0x3f0] sm:$0xff]
    %v266 = vld [vmem:[#allocation5 + $0x3f8] sm:$0xff]
    %v267 = vld [vmem:[#allocation5 + $0x400] sm:$0xff]
    %v268 = vld [vmem:[#allocation5 + $0x408] sm:$0xff]
    %v269 = vld [vmem:[#allocation5 + $0x410] sm:$0xff]
    %v270 = vld [vmem:[#allocation5 + $0x418] sm:$0xff]
    %v271 = vld [vmem:[#allocation5 + $0x420] sm:$0xff]
    %v272 = vld [vmem:[#allocation5 + $0x428] sm:$0xff]
    %v273 = vld [vmem:[#allocation5 + $0x430] sm:$0xff]
    %v274 = vld [vmem:[#allocation5 + $0x438] sm:$0xff]
    %v275 = vld [vmem:[#allocation5 + $0x440] sm:$0xff]
    %v276 = vld [vmem:[#allocation5 + $0x448] sm:$0xff]
    %v277 = vld [vmem:[#allocation5 + $0x450] sm:$0xff]
    %v278 = vld [vmem:[#allocation5 + $0x458] sm:$0xff]
    %v279 = vld [vmem:[#allocation5 + $0x460] sm:$0xff]
    %v280 = vld [vmem:[#allocation5 + $0x468] sm:$0xff]
    %v281 = vld [vmem:[#allocation5 + $0x470] sm:$0xff]
    %v282 = vld [vmem:[#allocation5 + $0x478] sm:$0xff]
    %v283 = vld [vmem:[#allocation5 + $0x480] sm:$0xff]
    %v284 = vld [vmem:[#allocation5 + $0x488] sm:$0xff]
    %v285 = vld [vmem:[#allocation5 + $0x490] sm:$0xff]
    %v286 = vld [vmem:[#allocation5 + $0x498] sm:$0xff]
    %v287 = vld [vmem:[#allocation5 + $0x4a0] sm:$0xff]
    %v288 = vld [vmem:[#allocation5 + $0x4a8] sm:$0xff]
    %v289 = vld [vmem:[#allocation5 + $0x4b0] sm:$0xff]
    %v290 = vld [vmem:[#allocation5 + $0x4b8] sm:$0xff]
    %v291 = vld [vmem:[#allocation5 + $0x4c0] sm:$0xff]
    %v292 = vld [vmem:[#allocation5 + $0x4c8] sm:$0xff]
    %v293 = vld [vmem:[#allocation5 + $0x4d0] sm:$0xff]
    %v294 = vld [vmem:[#allocation5 + $0x4d8] sm:$0xff]
    %v295 = vld [vmem:[#allocation5 + $0x4e0] sm:$0xff]
    %v296 = vld [vmem:[#allocation5 + $0x4e8] sm:$0xff]
    %v297 = vld [vmem:[#allocation5 + $0x4f0] sm:$0xff]
    %v298 = vld [vmem:[#allocation5 + $0x4f8] sm:$0xff]
    %v299 = vld [vmem:[#allocation5 + $0x500] sm:$0xff]
    %v300 = vld [vmem:[#allocation5 + $0x508] sm:$0xff]
    %v301 = vld [vmem:[#allocation5 + $0x510] sm:$0xff]
    %v302 = vld [vmem:[#allocation5 + $0x518] sm:$0xff]
    %v303 = vld [vmem:[#allocation5 + $0x520] sm:$0xff]
    %v304 = vld [vmem:[#allocation5 + $0x528] sm:$0xff]
    %v305 = vld [vmem:[#allocation5 + $0x530] sm:$0xff]
    %v306 = vld [vmem:[#allocation5 + $0x538] sm:$0xff]
    %v307 = vld [vmem:[#allocation5 + $0x540] sm:$0xff]
    %v308 = vld [vmem:[#allocation5 + $0x548] sm:$0xff]
    %v309 = vld [vmem:[#allocation5 + $0x550] sm:$0xff]
    %v310 = vld [vmem:[#allocation5 + $0x558] sm:$0xff]
    %v311 = vld [vmem:[#allocation5 + $0x560] sm:$0xff]
    %v312 = vld [vmem:[#allocation5 + $0x568] sm:$0xff]
    %v313 = vld [vmem:[#allocation5 + $0x570] sm:$0xff]
    %v314 = vld [vmem:[#allocation5 + $0x578] sm:$0xff]
    %v315 = vld [vmem:[#allocation5 + $0x580] sm:$0xff]
    %v316 = vld [vmem:[#allocation5 + $0x588] sm:$0xff]
    %v317 = vld [vmem:[#allocation5 + $0x590] sm:$0xff]
    %v318 = vld [vmem:[#allocation5 + $0x598] sm:$0xff]
    %v319 = vld [vmem:[#allocation5 + $0x5a0] sm:$0xff]
    %v320 = vld [vmem:[#allocation5 + $0x5a8] sm:$0xff]
    %v321 = vld [vmem:[#allocation5 + $0x5b0] sm:$0xff]
    %v322 = vld [vmem:[#allocation5 + $0x5b8] sm:$0xff]
    %v323 = vld [vmem:[#allocation5 + $0x5c0] sm:$0xff]
    %v324 = vld [vmem:[#allocation5 + $0x5c8] sm:$0xff]
    %v325 = vld [vmem:[#allocation5 + $0x5d0] sm:$0xff]
    %v326 = vld [vmem:[#allocation5 + $0x5d8] sm:$0xff]
    %v327 = vld [vmem:[#allocation5 + $0x5e0] sm:$0xff]
    %v328 = vld [vmem:[#allocation5 + $0x5e8] sm:$0xff]
    %v329 = vld [vmem:[#allocation5 + $0x5f0] sm:$0xff]
    %v330 = vld [vmem:[#allocation5 + $0x5f8] sm:$0xff]
    %v331 = vld [vmem:[#allocation7] sm:$0xf]
    %v333 = vperm.slane %v331, 0
    %v334 = vperm.slane %v331, 1
    %v335 = vperm.slane %v331, 2
    %v336 = vperm.slane %v331, 3
    %v344 = vunpack.c.l.b16 %v136
    %v345 = vunpack.c.h.b16 %v136
    %v346 = vunpack.c.l.b16 %v137
    %v347 = vunpack.c.h.b16 %v137
    %v348 = vunpack.c.l.b16 %v138
    %v349 = vunpack.c.h.b16 %v138
    %v350 = vpack.c.b16 %v344, %v344
    %v351 = vpack.c.b16 %v345, %v345
    %v352 = vpack.c.b16 %v346, %v346
    %v353 = vpack.c.b16 %v347, %v347
    %v354 = vpack.c.b16 %v348, %v348
    %v355 = vpack.c.b16 %v349, %v349
    %v554 = vunpack.c.l.b16 %v139
    %v555 = vunpack.c.h.b16 %v139
    %v556 = vunpack.c.l.b16 %v140
    %v557 = vunpack.c.h.b16 %v140
    %v558 = vunpack.c.l.b16 %v141
    %v559 = vunpack.c.h.b16 %v141
    %v560 = vunpack.c.l.b16 %v142
    %v561 = vunpack.c.h.b16 %v142
    %v562 = vunpack.c.l.b16 %v143
    %v563 = vunpack.c.h.b16 %v143
    %v564 = vunpack.c.l.b16 %v144
    %v565 = vunpack.c.h.b16 %v144
    %v566 = vunpack.c.l.b16 %v145
    %v567 = vunpack.c.h.b16 %v145
    %v568 = vunpack.c.l.b16 %v146
    %v569 = vunpack.c.h.b16 %v146
    %v570 = vunpack.c.l.b16 %v147
    %v571 = vunpack.c.h.b16 %v147
    %v572 = vunpack.c.l.b16 %v148
    %v573 = vunpack.c.h.b16 %v148
    %v574 = vunpack.c.l.b16 %v149
    %v575 = vunpack.c.h.b16 %v149
    %v576 = vunpack.c.l.b16 %v150
    %v577 = vunpack.c.h.b16 %v150
    %v578 = vunpack.c.l.b16 %v151
    %v579 = vunpack.c.h.b16 %v151
    %v580 = vunpack.c.l.b16 %v152
    %v581 = vunpack.c.h.b16 %v152
    %v582 = vunpack.c.l.b16 %v153
    %v583 = vunpack.c.h.b16 %v153
    %v584 = vunpack.c.l.b16 %v154
    %v585 = vunpack.c.h.b16 %v154
    %v586 = vunpack.c.l.b16 %v155
    %v587 = vunpack.c.h.b16 %v155
    %v588 = vunpack.c.l.b16 %v156
    %v589 = vunpack.c.h.b16 %v156
    %v590 = vunpack.c.l.b16 %v157
    %v591 = vunpack.c.h.b16 %v157
    %v592 = vunpack.c.l.b16 %v158
    %v593 = vunpack.c.h.b16 %v158
    %v594 = vunpack.c.l.b16 %v159
    %v595 = vunpack.c.h.b16 %v159
    %v596 = vunpack.c.l.b16 %v160
    %v597 = vunpack.c.h.b16 %v160
    %v598 = vunpack.c.l.b16 %v161
    %v599 = vunpack.c.h.b16 %v161
    %v600 = vunpack.c.l.b16 %v162
    %v601 = vunpack.c.h.b16 %v162
    %v602 = vunpack.c.l.b16 %v163
    %v603 = vunpack.c.h.b16 %v163
    %v604 = vunpack.c.l.b16 %v164
    %v605 = vunpack.c.h.b16 %v164
    %v606 = vunpack.c.l.b16 %v165
    %v607 = vunpack.c.h.b16 %v165
    %v608 = vunpack.c.l.b16 %v166
    %v609 = vunpack.c.h.b16 %v166
    %v610 = vunpack.c.l.b16 %v167
    %v611 = vunpack.c.h.b16 %v167
    %v612 = vunpack.c.l.b16 %v168
    %v613 = vunpack.c.h.b16 %v168
    %v614 = vunpack.c.l.b16 %v169
    %v615 = vunpack.c.h.b16 %v169
    %v616 = vunpack.c.l.b16 %v170
    %v617 = vunpack.c.h.b16 %v170
    %v618 = vunpack.c.l.b16 %v171
    %v619 = vunpack.c.h.b16 %v171
    %v620 = vunpack.c.l.b16 %v172
    %v621 = vunpack.c.h.b16 %v172
    %v622 = vunpack.c.l.b16 %v173
    %v623 = vunpack.c.h.b16 %v173
    %v624 = vunpack.c.l.b16 %v174
    %v625 = vunpack.c.h.b16 %v174
    %v626 = vunpack.c.l.b16 %v175
    %v627 = vunpack.c.h.b16 %v175
    %v628 = vunpack.c.l.b16 %v176
    %v629 = vunpack.c.h.b16 %v176
    %v630 = vunpack.c.l.b16 %v177
    %v631 = vunpack.c.h.b16 %v177
    %v632 = vunpack.c.l.b16 %v178
    %v633 = vunpack.c.h.b16 %v178
    %v634 = vunpack.c.l.b16 %v179
    %v635 = vunpack.c.h.b16 %v179
    %v636 = vunpack.c.l.b16 %v180
    %v637 = vunpack.c.h.b16 %v180
    %v638 = vunpack.c.l.b16 %v181
    %v639 = vunpack.c.h.b16 %v181
    %v640 = vunpack.c.l.b16 %v182
    %v641 = vunpack.c.h.b16 %v182
    %v642 = vunpack.c.l.b16 %v183
    %v643 = vunpack.c.h.b16 %v183
    %v644 = vunpack.c.l.b16 %v184
    %v645 = vunpack.c.h.b16 %v184
    %v646 = vunpack.c.l.b16 %v185
    %v647 = vunpack.c.h.b16 %v185
    %v648 = vunpack.c.l.b16 %v186
    %v649 = vunpack.c.h.b16 %v186
    %v650 = vunpack.c.l.b16 %v187
    %v651 = vunpack.c.h.b16 %v187
    %v652 = vunpack.c.l.b16 %v188
    %v653 = vunpack.c.h.b16 %v188
    %v654 = vunpack.c.l.b16 %v189
    %v655 = vunpack.c.h.b16 %v189
    %v656 = vunpack.c.l.b16 %v190
    %v657 = vunpack.c.h.b16 %v190
    %v658 = vunpack.c.l.b16 %v191
    %v659 = vunpack.c.h.b16 %v191
    %v660 = vunpack.c.l.b16 %v192
    %v661 = vunpack.c.h.b16 %v192
    %v662 = vunpack.c.l.b16 %v193
    %v663 = vunpack.c.h.b16 %v193
    %v664 = vunpack.c.l.b16 %v194
    %v665 = vunpack.c.h.b16 %v194
    %v666 = vunpack.c.l.b16 %v195
    %v667 = vunpack.c.h.b16 %v195
    %v668 = vunpack.c.l.b16 %v196
    %v669 = vunpack.c.h.b16 %v196
    %v670 = vunpack.c.l.b16 %v197
    %v671 = vunpack.c.h.b16 %v197
    %v672 = vunpack.c.l.b16 %v198
    %v673 = vunpack.c.h.b16 %v198
    %v674 = vunpack.c.l.b16 %v199
    %v675 = vunpack.c.h.b16 %v199
    %v676 = vunpack.c.l.b16 %v200
    %v677 = vunpack.c.h.b16 %v200
    %v678 = vunpack.c.l.b16 %v201
    %v679 = vunpack.c.h.b16 %v201
    %v680 = vunpack.c.l.b16 %v202
    %v681 = vunpack.c.h.b16 %v202
    %v682 = vunpack.c.l.b16 %v203
    %v683 = vunpack.c.h.b16 %v203
    %v684 = vunpack.c.l.b16 %v204
    %v685 = vunpack.c.h.b16 %v204
    %v686 = vunpack.c.l.b16 %v205
    %v687 = vunpack.c.h.b16 %v205
    %v688 = vunpack.c.l.b16 %v206
    %v689 = vunpack.c.h.b16 %v206
    %v690 = vunpack.c.l.b16 %v207
    %v691 = vunpack.c.h.b16 %v207
    %v692 = vunpack.c.l.b16 %v208
    %v693 = vunpack.c.h.b16 %v208
    %v694 = vunpack.c.l.b16 %v209
    %v695 = vunpack.c.h.b16 %v209
    %v696 = vunpack.c.l.b16 %v210
    %v697 = vunpack.c.h.b16 %v210
    %v698 = vunpack.c.l.b16 %v211
    %v699 = vunpack.c.h.b16 %v211
    %v700 = vunpack.c.l.b16 %v212
    %v701 = vunpack.c.h.b16 %v212
    %v702 = vunpack.c.l.b16 %v213
    %v703 = vunpack.c.h.b16 %v213
    %v704 = vunpack.c.l.b16 %v214
    %v705 = vunpack.c.h.b16 %v214
    %v706 = vunpack.c.l.b16 %v215
    %v707 = vunpack.c.h.b16 %v215
    %v708 = vunpack.c.l.b16 %v216
    %v709 = vunpack.c.h.b16 %v216
    %v710 = vunpack.c.l.b16 %v217
    %v711 = vunpack.c.h.b16 %v217
    %v712 = vunpack.c.l.b16 %v218
    %v713 = vunpack.c.h.b16 %v218
    %v714 = vunpack.c.l.b16 %v219
    %v715 = vunpack.c.h.b16 %v219
    %v716 = vunpack.c.l.b16 %v220
    %v717 = vunpack.c.h.b16 %v220
    %v718 = vunpack.c.l.b16 %v221
    %v719 = vunpack.c.h.b16 %v221
    %v720 = vunpack.c.l.b16 %v222
    %v721 = vunpack.c.h.b16 %v222
    %v722 = vunpack.c.l.b16 %v223
    %v723 = vunpack.c.h.b16 %v223
    %v724 = vunpack.c.l.b16 %v224
    %v725 = vunpack.c.h.b16 %v224
    %v726 = vunpack.c.l.b16 %v225
    %v727 = vunpack.c.h.b16 %v225
    %v728 = vunpack.c.l.b16 %v226
    %v729 = vunpack.c.h.b16 %v226
    %v730 = vunpack.c.l.b16 %v227
    %v731 = vunpack.c.h.b16 %v227
    %v732 = vunpack.c.l.b16 %v228
    %v733 = vunpack.c.h.b16 %v228
    %v734 = vunpack.c.l.b16 %v229
    %v735 = vunpack.c.h.b16 %v229
    %v736 = vunpack.c.l.b16 %v230
    %v737 = vunpack.c.h.b16 %v230
    %v738 = vunpack.c.l.b16 %v231
    %v739 = vunpack.c.h.b16 %v231
    %v740 = vunpack.c.l.b16 %v232
    %v741 = vunpack.c.h.b16 %v232
    %v742 = vunpack.c.l.b16 %v233
    %v743 = vunpack.c.h.b16 %v233
    %v744 = vunpack.c.l.b16 %v234
    %v745 = vunpack.c.h.b16 %v234
    %v746 = vunpack.c.l.b16 %v235
    %v747 = vunpack.c.h.b16 %v235
    %v748 = vunpack.c.l.b16 %v236
    %v749 = vunpack.c.h.b16 %v236
    %v750 = vunpack.c.l.b16 %v237
    %v751 = vunpack.c.h.b16 %v237
    %v752 = vunpack.c.l.b16 %v238
    %v753 = vunpack.c.h.b16 %v238
    %v754 = vunpack.c.l.b16 %v239
    %v755 = vunpack.c.h.b16 %v239
    %v756 = vunpack.c.l.b16 %v240
    %v757 = vunpack.c.h.b16 %v240
    %v758 = vunpack.c.l.b16 %v241
    %v759 = vunpack.c.h.b16 %v241
    %v760 = vunpack.c.l.b16 %v242
    %v761 = vunpack.c.h.b16 %v242
    %v762 = vunpack.c.l.b16 %v243
    %v763 = vunpack.c.h.b16 %v243
    %v764 = vunpack.c.l.b16 %v244
    %v765 = vunpack.c.h.b16 %v244
    %v766 = vunpack.c.l.b16 %v245
    %v767 = vunpack.c.h.b16 %v245
    %v768 = vunpack.c.l.b16 %v246
    %v769 = vunpack.c.h.b16 %v246
    %v770 = vunpack.c.l.b16 %v247
    %v771 = vunpack.c.h.b16 %v247
    %v772 = vunpack.c.l.b16 %v248
    %v773 = vunpack.c.h.b16 %v248
    %v774 = vunpack.c.l.b16 %v249
    %v775 = vunpack.c.h.b16 %v249
    %v776 = vunpack.c.l.b16 %v250
    %v777 = vunpack.c.h.b16 %v250
    %v778 = vunpack.c.l.b16 %v251
    %v779 = vunpack.c.h.b16 %v251
    %v780 = vunpack.c.l.b16 %v252
    %v781 = vunpack.c.h.b16 %v252
    %v782 = vunpack.c.l.b16 %v253
    %v783 = vunpack.c.h.b16 %v253
    %v784 = vunpack.c.l.b16 %v254
    %v785 = vunpack.c.h.b16 %v254
    %v786 = vunpack.c.l.b16 %v255
    %v787 = vunpack.c.h.b16 %v255
    %v788 = vunpack.c.l.b16 %v256
    %v789 = vunpack.c.h.b16 %v256
    %v790 = vunpack.c.l.b16 %v257
    %v791 = vunpack.c.h.b16 %v257
    %v792 = vunpack.c.l.b16 %v258
    %v793 = vunpack.c.h.b16 %v258
    %v794 = vunpack.c.l.b16 %v259
    %v795 = vunpack.c.h.b16 %v259
    %v796 = vunpack.c.l.b16 %v260
    %v797 = vunpack.c.h.b16 %v260
    %v798 = vunpack.c.l.b16 %v261
    %v799 = vunpack.c.h.b16 %v261
    %v800 = vunpack.c.l.b16 %v262
    %v801 = vunpack.c.h.b16 %v262
    %v802 = vunpack.c.l.b16 %v263
    %v803 = vunpack.c.h.b16 %v263
    %v804 = vunpack.c.l.b16 %v264
    %v805 = vunpack.c.h.b16 %v264
    %v806 = vunpack.c.l.b16 %v265
    %v807 = vunpack.c.h.b16 %v265
    %v808 = vunpack.c.l.b16 %v266
    %v809 = vunpack.c.h.b16 %v266
    %v810 = vunpack.c.l.b16 %v267
    %v811 = vunpack.c.h.b16 %v267
    %v812 = vunpack.c.l.b16 %v268
    %v813 = vunpack.c.h.b16 %v268
    %v814 = vunpack.c.l.b16 %v269
    %v815 = vunpack.c.h.b16 %v269
    %v816 = vunpack.c.l.b16 %v270
    %v817 = vunpack.c.h.b16 %v270
    %v818 = vunpack.c.l.b16 %v271
    %v819 = vunpack.c.h.b16 %v271
    %v820 = vunpack.c.l.b16 %v272
    %v821 = vunpack.c.h.b16 %v272
    %v822 = vunpack.c.l.b16 %v273
    %v823 = vunpack.c.h.b16 %v273
    %v824 = vunpack.c.l.b16 %v274
    %v825 = vunpack.c.h.b16 %v274
    %v826 = vunpack.c.l.b16 %v275
    %v827 = vunpack.c.h.b16 %v275
    %v828 = vunpack.c.l.b16 %v276
    %v829 = vunpack.c.h.b16 %v276
    %v830 = vunpack.c.l.b16 %v277
    %v831 = vunpack.c.h.b16 %v277
    %v832 = vunpack.c.l.b16 %v278
    %v833 = vunpack.c.h.b16 %v278
    %v834 = vunpack.c.l.b16 %v279
    %v835 = vunpack.c.h.b16 %v279
    %v836 = vunpack.c.l.b16 %v280
    %v837 = vunpack.c.h.b16 %v280
    %v838 = vunpack.c.l.b16 %v281
    %v839 = vunpack.c.h.b16 %v281
    %v840 = vunpack.c.l.b16 %v282
    %v841 = vunpack.c.h.b16 %v282
    %v842 = vunpack.c.l.b16 %v283
    %v843 = vunpack.c.h.b16 %v283
    %v844 = vunpack.c.l.b16 %v284
    %v845 = vunpack.c.h.b16 %v284
    %v846 = vunpack.c.l.b16 %v285
    %v847 = vunpack.c.h.b16 %v285
    %v848 = vunpack.c.l.b16 %v286
    %v849 = vunpack.c.h.b16 %v286
    %v850 = vunpack.c.l.b16 %v287
    %v851 = vunpack.c.h.b16 %v287
    %v852 = vunpack.c.l.b16 %v288
    %v853 = vunpack.c.h.b16 %v288
    %v854 = vunpack.c.l.b16 %v289
    %v855 = vunpack.c.h.b16 %v289
    %v856 = vunpack.c.l.b16 %v290
    %v857 = vunpack.c.h.b16 %v290
    %v858 = vunpack.c.l.b16 %v291
    %v859 = vunpack.c.h.b16 %v291
    %v860 = vunpack.c.l.b16 %v292
    %v861 = vunpack.c.h.b16 %v292
    %v862 = vunpack.c.l.b16 %v293
    %v863 = vunpack.c.h.b16 %v293
    %v864 = vunpack.c.l.b16 %v294
    %v865 = vunpack.c.h.b16 %v294
    %v866 = vunpack.c.l.b16 %v295
    %v867 = vunpack.c.h.b16 %v295
    %v868 = vunpack.c.l.b16 %v296
    %v869 = vunpack.c.h.b16 %v296
    %v870 = vunpack.c.l.b16 %v297
    %v871 = vunpack.c.h.b16 %v297
    %v872 = vunpack.c.l.b16 %v298
    %v873 = vunpack.c.h.b16 %v298
    %v874 = vunpack.c.l.b16 %v299
    %v875 = vunpack.c.h.b16 %v299
    %v876 = vunpack.c.l.b16 %v300
    %v877 = vunpack.c.h.b16 %v300
    %v878 = vunpack.c.l.b16 %v301
    %v879 = vunpack.c.h.b16 %v301
    %v880 = vunpack.c.l.b16 %v302
    %v881 = vunpack.c.h.b16 %v302
    %v882 = vunpack.c.l.b16 %v303
    %v883 = vunpack.c.h.b16 %v303
    %v884 = vunpack.c.l.b16 %v304
    %v885 = vunpack.c.h.b16 %v304
    %v886 = vunpack.c.l.b16 %v305
    %v887 = vunpack.c.h.b16 %v305
    %v888 = vunpack.c.l.b16 %v306
    %v889 = vunpack.c.h.b16 %v306
    %v890 = vunpack.c.l.b16 %v307
    %v891 = vunpack.c.h.b16 %v307
    %v892 = vunpack.c.l.b16 %v308
    %v893 = vunpack.c.h.b16 %v308
    %v894 = vunpack.c.l.b16 %v309
    %v895 = vunpack.c.h.b16 %v309
    %v896 = vunpack.c.l.b16 %v310
    %v897 = vunpack.c.h.b16 %v310
    %v898 = vunpack.c.l.b16 %v311
    %v899 = vunpack.c.h.b16 %v311
    %v900 = vunpack.c.l.b16 %v312
    %v901 = vunpack.c.h.b16 %v312
    %v902 = vunpack.c.l.b16 %v313
    %v903 = vunpack.c.h.b16 %v313
    %v904 = vunpack.c.l.b16 %v314
    %v905 = vunpack.c.h.b16 %v314
    %v906 = vunpack.c.l.b16 %v315
    %v907 = vunpack.c.h.b16 %v315
    %v908 = vunpack.c.l.b16 %v316
    %v909 = vunpack.c.h.b16 %v316
    %v910 = vunpack.c.l.b16 %v317
    %v911 = vunpack.c.h.b16 %v317
    %v912 = vunpack.c.l.b16 %v318
    %v913 = vunpack.c.h.b16 %v318
    %v914 = vunpack.c.l.b16 %v319
    %v915 = vunpack.c.h.b16 %v319
    %v916 = vunpack.c.l.b16 %v320
    %v917 = vunpack.c.h.b16 %v320
    %v918 = vunpack.c.l.b16 %v321
    %v919 = vunpack.c.h.b16 %v321
    %v920 = vunpack.c.l.b16 %v322
    %v921 = vunpack.c.h.b16 %v322
    %v922 = vunpack.c.l.b16 %v323
    %v923 = vunpack.c.h.b16 %v323
    %v924 = vunpack.c.l.b16 %v324
    %v925 = vunpack.c.h.b16 %v324
    %v926 = vunpack.c.l.b16 %v325
    %v927 = vunpack.c.h.b16 %v325
    %v928 = vunpack.c.l.b16 %v326
    %v929 = vunpack.c.h.b16 %v326
    %v930 = vunpack.c.l.b16 %v327
    %v931 = vunpack.c.h.b16 %v327
    %v932 = vunpack.c.l.b16 %v328
    %v933 = vunpack.c.h.b16 %v328
    %v934 = vunpack.c.l.b16 %v329
    %v935 = vunpack.c.h.b16 %v329
    %v936 = vunpack.c.l.b16 %v330
    %v937 = vunpack.c.h.b16 %v330
    %v938 = vpack.c.b16 %v558, %v554
    %v939 = vpack.c.b16 %v559, %v555
    %v940 = vpack.c.b16 %v560, %v556
    %v941 = vpack.c.b16 %v561, %v557
    %v942 = vpack.c.b16 %v566, %v562
    %v943 = vpack.c.b16 %v567, %v563
    %v944 = vpack.c.b16 %v568, %v564
    %v945 = vpack.c.b16 %v569, %v565
    %v946 = vpack.c.b16 %v574, %v570
    %v947 = vpack.c.b16 %v575, %v571
    %v948 = vpack.c.b16 %v576, %v572
    %v949 = vpack.c.b16 %v577, %v573
    %v950 = vpack.c.b16 %v582, %v578
    %v951 = vpack.c.b16 %v583, %v579
    %v952 = vpack.c.b16 %v584, %v580
    %v953 = vpack.c.b16 %v585, %v581
    %v954 = vpack.c.b16 %v590, %v586
    %v955 = vpack.c.b16 %v591, %v587
    %v956 = vpack.c.b16 %v592, %v588
    %v957 = vpack.c.b16 %v593, %v589
    %v958 = vpack.c.b16 %v598, %v594
    %v959 = vpack.c.b16 %v599, %v595
    %v960 = vpack.c.b16 %v600, %v596
    %v961 = vpack.c.b16 %v601, %v597
    %v962 = vpack.c.b16 %v606, %v602
    %v963 = vpack.c.b16 %v607, %v603
    %v964 = vpack.c.b16 %v608, %v604
    %v965 = vpack.c.b16 %v609, %v605
    %v966 = vpack.c.b16 %v614, %v610
    %v967 = vpack.c.b16 %v615, %v611
    %v968 = vpack.c.b16 %v616, %v612
    %v969 = vpack.c.b16 %v617, %v613
    %v970 = vpack.c.b16 %v622, %v618
    %v971 = vpack.c.b16 %v623, %v619
    %v972 = vpack.c.b16 %v624, %v620
    %v973 = vpack.c.b16 %v625, %v621
    %v974 = vpack.c.b16 %v630, %v626
    %v975 = vpack.c.b16 %v631, %v627
    %v976 = vpack.c.b16 %v632, %v628
    %v977 = vpack.c.b16 %v633, %v629
    %v978 = vpack.c.b16 %v638, %v634
    %v979 = vpack.c.b16 %v639, %v635
    %v980 = vpack.c.b16 %v640, %v636
    %v981 = vpack.c.b16 %v641, %v637
    %v982 = vpack.c.b16 %v646, %v642
    %v983 = vpack.c.b16 %v647, %v643
    %v984 = vpack.c.b16 %v648, %v644
    %v985 = vpack.c.b16 %v649, %v645
    %v986 = vpack.c.b16 %v654, %v650
    %v987 = vpack.c.b16 %v655, %v651
    %v988 = vpack.c.b16 %v656, %v652
    %v989 = vpack.c.b16 %v657, %v653
    %v990 = vpack.c.b16 %v662, %v658
    %v991 = vpack.c.b16 %v663, %v659
    %v992 = vpack.c.b16 %v664, %v660
    %v993 = vpack.c.b16 %v665, %v661
    %v994 = vpack.c.b16 %v670, %v666
    %v995 = vpack.c.b16 %v671, %v667
    %v996 = vpack.c.b16 %v672, %v668
    %v997 = vpack.c.b16 %v673, %v669
    %v998 = vpack.c.b16 %v678, %v674
    %v999 = vpack.c.b16 %v679, %v675
    %v1000 = vpack.c.b16 %v680, %v676
    %v1001 = vpack.c.b16 %v681, %v677
    %v1002 = vpack.c.b16 %v686, %v682
    %v1003 = vpack.c.b16 %v687, %v683
    %v1004 = vpack.c.b16 %v688, %v684
    %v1005 = vpack.c.b16 %v689, %v685
    %v1006 = vpack.c.b16 %v694, %v690
    %v1007 = vpack.c.b16 %v695, %v691
    %v1008 = vpack.c.b16 %v696, %v692
    %v1009 = vpack.c.b16 %v697, %v693
    %v1010 = vpack.c.b16 %v702, %v698
    %v1011 = vpack.c.b16 %v703, %v699
    %v1012 = vpack.c.b16 %v704, %v700
    %v1013 = vpack.c.b16 %v705, %v701
    %v1014 = vpack.c.b16 %v710, %v706
    %v1015 = vpack.c.b16 %v711, %v707
    %v1016 = vpack.c.b16 %v712, %v708
    %v1017 = vpack.c.b16 %v713, %v709
    %v1018 = vpack.c.b16 %v718, %v714
    %v1019 = vpack.c.b16 %v719, %v715
    %v1020 = vpack.c.b16 %v720, %v716
    %v1021 = vpack.c.b16 %v721, %v717
    %v1022 = vpack.c.b16 %v726, %v722
    %v1023 = vpack.c.b16 %v727, %v723
    %v1024 = vpack.c.b16 %v728, %v724
    %v1025 = vpack.c.b16 %v729, %v725
    %v1026 = vpack.c.b16 %v734, %v730
    %v1027 = vpack.c.b16 %v735, %v731
    %v1028 = vpack.c.b16 %v736, %v732
    %v1029 = vpack.c.b16 %v737, %v733
    %v1030 = vpack.c.b16 %v742, %v738
    %v1031 = vpack.c.b16 %v743, %v739
    %v1032 = vpack.c.b16 %v744, %v740
    %v1033 = vpack.c.b16 %v745, %v741
    %v1034 = vpack.c.b16 %v750, %v746
    %v1035 = vpack.c.b16 %v751, %v747
    %v1036 = vpack.c.b16 %v752, %v748
    %v1037 = vpack.c.b16 %v753, %v749
    %v1038 = vpack.c.b16 %v758, %v754
    %v1039 = vpack.c.b16 %v759, %v755
    %v1040 = vpack.c.b16 %v760, %v756
    %v1041 = vpack.c.b16 %v761, %v757
    %v1042 = vpack.c.b16 %v766, %v762
    %v1043 = vpack.c.b16 %v767, %v763
    %v1044 = vpack.c.b16 %v768, %v764
    %v1045 = vpack.c.b16 %v769, %v765
    %v1046 = vpack.c.b16 %v774, %v770
    %v1047 = vpack.c.b16 %v775, %v771
    %v1048 = vpack.c.b16 %v776, %v772
    %v1049 = vpack.c.b16 %v777, %v773
    %v1050 = vpack.c.b16 %v782, %v778
    %v1051 = vpack.c.b16 %v783, %v779
    %v1052 = vpack.c.b16 %v784, %v780
    %v1053 = vpack.c.b16 %v785, %v781
    %v1054 = vpack.c.b16 %v790, %v786
    %v1055 = vpack.c.b16 %v791, %v787
    %v1056 = vpack.c.b16 %v792, %v788
    %v1057 = vpack.c.b16 %v793, %v789
    %v1058 = vpack.c.b16 %v798, %v794
    %v1059 = vpack.c.b16 %v799, %v795
    %v1060 = vpack.c.b16 %v800, %v796
    %v1061 = vpack.c.b16 %v801, %v797
    %v1062 = vpack.c.b16 %v806, %v802
    %v1063 = vpack.c.b16 %v807, %v803
    %v1064 = vpack.c.b16 %v808, %v804
    %v1065 = vpack.c.b16 %v809, %v805
    %v1066 = vpack.c.b16 %v814, %v810
    %v1067 = vpack.c.b16 %v815, %v811
    %v1068 = vpack.c.b16 %v816, %v812
    %v1069 = vpack.c.b16 %v817, %v813
    %v1070 = vpack.c.b16 %v822, %v818
    %v1071 = vpack.c.b16 %v823, %v819
    %v1072 = vpack.c.b16 %v824, %v820
    %v1073 = vpack.c.b16 %v825, %v821
    %v1074 = vpack.c.b16 %v830, %v826
    %v1075 = vpack.c.b16 %v831, %v827
    %v1076 = vpack.c.b16 %v832, %v828
    %v1077 = vpack.c.b16 %v833, %v829
    %v1078 = vpack.c.b16 %v838, %v834
    %v1079 = vpack.c.b16 %v839, %v835
    %v1080 = vpack.c.b16 %v840, %v836
    %v1081 = vpack.c.b16 %v841, %v837
    %v1082 = vpack.c.b16 %v846, %v842
    %v1083 = vpack.c.b16 %v847, %v843
    %v1084 = vpack.c.b16 %v848, %v844
    %v1085 = vpack.c.b16 %v849, %v845
    %v1086 = vpack.c.b16 %v854, %v850
    %v1087 = vpack.c.b16 %v855, %v851
    %v1088 = vpack.c.b16 %v856, %v852
    %v1089 = vpack.c.b16 %v857, %v853
    %v1090 = vpack.c.b16 %v862, %v858
    %v1091 = vpack.c.b16 %v863, %v859
    %v1092 = vpack.c.b16 %v864, %v860
    %v1093 = vpack.c.b16 %v865, %v861
    %v1094 = vpack.c.b16 %v870, %v866
    %v1095 = vpack.c.b16 %v871, %v867
    %v1096 = vpack.c.b16 %v872, %v868
    %v1097 = vpack.c.b16 %v873, %v869
    %v1098 = vpack.c.b16 %v878, %v874
    %v1099 = vpack.c.b16 %v879, %v875
    %v1100 = vpack.c.b16 %v880, %v876
    %v1101 = vpack.c.b16 %v881, %v877
    %v1102 = vpack.c.b16 %v886, %v882
    %v1103 = vpack.c.b16 %v887, %v883
    %v1104 = vpack.c.b16 %v888, %v884
    %v1105 = vpack.c.b16 %v889, %v885
    %v1106 = vpack.c.b16 %v894, %v890
    %v1107 = vpack.c.b16 %v895, %v891
    %v1108 = vpack.c.b16 %v896, %v892
    %v1109 = vpack.c.b16 %v897, %v893
    %v1110 = vpack.c.b16 %v902, %v898
    %v1111 = vpack.c.b16 %v903, %v899
    %v1112 = vpack.c.b16 %v904, %v900
    %v1113 = vpack.c.b16 %v905, %v901
    %v1114 = vpack.c.b16 %v910, %v906
    %v1115 = vpack.c.b16 %v911, %v907
    %v1116 = vpack.c.b16 %v912, %v908
    %v1117 = vpack.c.b16 %v913, %v909
    %v1118 = vpack.c.b16 %v918, %v914
    %v1119 = vpack.c.b16 %v919, %v915
    %v1120 = vpack.c.b16 %v920, %v916
    %v1121 = vpack.c.b16 %v921, %v917
    %v1122 = vpack.c.b16 %v926, %v922
    %v1123 = vpack.c.b16 %v927, %v923
    %v1124 = vpack.c.b16 %v928, %v924
    %v1125 = vpack.c.b16 %v929, %v925
    %v1126 = vpack.c.b16 %v934, %v930
    %v1127 = vpack.c.b16 %v935, %v931
    %v1128 = vpack.c.b16 %v936, %v932
    %v1129 = vpack.c.b16 %v937, %v933
    %1322 = vmatpush.bf16.msra.mxu0 %v966
    %1323 = vmatpush.bf16.msra.mxu0 %v962
    %1324 = vmatpush.bf16.msra.mxu0 %v958
    %1325 = vmatpush.bf16.msra.mxu0 %v954
    %1326 = vmatpush.bf16.msra.mxu0 %v950
    %1327 = vmatpush.bf16.msra.mxu0 %v946
    %1328 = vmatpush.bf16.msra.mxu0 %v942
    %1329 = vmatpush.bf16.msra.mxu0 %v938
    %1330 = vmatmul.bf16.gmra.mxu0 %v350
    %v1331 = vpop.f32.mrf.mxu0
    %v1332 = vadd.f32 %v333, %v1331
    %v1333 = vpop.f32.mrf.mxu0
    %1334 = vdwg.mxu0
    %1335 = vmatpush.bf16.msra.mxu0 %v998
    %1336 = vmatpush.bf16.msra.mxu0 %v994
    %1337 = vmatpush.bf16.msra.mxu0 %v990
    %1338 = vmatpush.bf16.msra.mxu0 %v986
    %1339 = vmatpush.bf16.msra.mxu0 %v982
    %1340 = vmatpush.bf16.msra.mxu0 %v978
    %1341 = vmatpush.bf16.msra.mxu0 %v974
    %1342 = vmatpush.bf16.msra.mxu0 %v970
    %1343 = vmatmul.bf16.gmra.mxu0 %v351
    %v1344 = vpop.f32.mrf.mxu0
    %v1345 = vadd.f32 %v1332, %v1344
    %v1346 = vpop.f32.mrf.mxu0
    %1347 = vdwg.mxu0
    %1348 = vmatpush.bf16.msra.mxu0 %v1030
    %1349 = vmatpush.bf16.msra.mxu0 %v1026
    %1350 = vmatpush.bf16.msra.mxu0 %v1022
    %1351 = vmatpush.bf16.msra.mxu0 %v1018
    %1352 = vmatpush.bf16.msra.mxu0 %v1014
    %1353 = vmatpush.bf16.msra.mxu0 %v1010
    %1354 = vmatpush.bf16.msra.mxu0 %v1006
    %1355 = vmatpush.bf16.msra.mxu0 %v1002
    %1356 = vmatmul.bf16.gmra.mxu0 %v352
    %v1357 = vpop.f32.mrf.mxu0
    %v1358 = vadd.f32 %v1345, %v1357
    %v1359 = vpop.f32.mrf.mxu0
    %1360 = vdwg.mxu0
    %1361 = vmatpush.bf16.msra.mxu0 %v1062
    %1362 = vmatpush.bf16.msra.mxu0 %v1058
    %1363 = vmatpush.bf16.msra.mxu0 %v1054
    %1364 = vmatpush.bf16.msra.mxu0 %v1050
    %1365 = vmatpush.bf16.msra.mxu0 %v1046
    %1366 = vmatpush.bf16.msra.mxu0 %v1042
    %1367 = vmatpush.bf16.msra.mxu0 %v1038
    %1368 = vmatpush.bf16.msra.mxu0 %v1034
    %1369 = vmatmul.bf16.gmra.mxu0 %v353
    %v1370 = vpop.f32.mrf.mxu0
    %v1371 = vadd.f32 %v1358, %v1370
    %v1372 = vpop.f32.mrf.mxu0
    %1373 = vdwg.mxu0
    %1374 = vmatpush.bf16.msra.mxu0 %v1094
    %1375 = vmatpush.bf16.msra.mxu0 %v1090
    %1376 = vmatpush.bf16.msra.mxu0 %v1086
    %1377 = vmatpush.bf16.msra.mxu0 %v1082
    %1378 = vmatpush.bf16.msra.mxu0 %v1078
    %1379 = vmatpush.bf16.msra.mxu0 %v1074
    %1380 = vmatpush.bf16.msra.mxu0 %v1070
    %1381 = vmatpush.bf16.msra.mxu0 %v1066
    %1382 = vmatmul.bf16.gmra.mxu0 %v354
    %v1383 = vpop.f32.mrf.mxu0
    %v1384 = vadd.f32 %v1371, %v1383
    %v1385 = vpop.f32.mrf.mxu0
    %1386 = vdwg.mxu0
    %1387 = vmatpush.bf16.msra.mxu0 %v1126
    %1388 = vmatpush.bf16.msra.mxu0 %v1122
    %1389 = vmatpush.bf16.msra.mxu0 %v1118
    %1390 = vmatpush.bf16.msra.mxu0 %v1114
    %1391 = vmatpush.bf16.msra.mxu0 %v1110
    %1392 = vmatpush.bf16.msra.mxu0 %v1106
    %1393 = vmatpush.bf16.msra.mxu0 %v1102
    %1394 = vmatpush.bf16.msra.mxu0 %v1098
    %1395 = vmatmul.bf16.gmra.mxu0 %v355
    %v1396 = vpop.f32.mrf.mxu0
    %v1397 = vadd.f32 %v1384, %v1396
    %v1398 = vpop.f32.mrf.mxu0
    %1399 = vdwg.mxu0
    %1400 = vmatpush.bf16.msra.mxu0 %v967
    %1401 = vmatpush.bf16.msra.mxu0 %v963
    %1402 = vmatpush.bf16.msra.mxu0 %v959
    %1403 = vmatpush.bf16.msra.mxu0 %v955
    %1404 = vmatpush.bf16.msra.mxu0 %v951
    %1405 = vmatpush.bf16.msra.mxu0 %v947
    %1406 = vmatpush.bf16.msra.mxu0 %v943
    %1407 = vmatpush.bf16.msra.mxu0 %v939
    %1408 = vmatmul.bf16.gmra.mxu0 %v350
    %v1409 = vpop.f32.mrf.mxu0
    %v1410 = vadd.f32 %v334, %v1409
    %v1411 = vpop.f32.mrf.mxu0
    %1412 = vdwg.mxu0
    %1413 = vmatpush.bf16.msra.mxu0 %v999
    %1414 = vmatpush.bf16.msra.mxu0 %v995
    %1415 = vmatpush.bf16.msra.mxu0 %v991
    %1416 = vmatpush.bf16.msra.mxu0 %v987
    %1417 = vmatpush.bf16.msra.mxu0 %v983
    %1418 = vmatpush.bf16.msra.mxu0 %v979
    %1419 = vmatpush.bf16.msra.mxu0 %v975
    %1420 = vmatpush.bf16.msra.mxu0 %v971
    %1421 = vmatmul.bf16.gmra.mxu0 %v351
    %v1422 = vpop.f32.mrf.mxu0
    %v1423 = vadd.f32 %v1410, %v1422
    %v1424 = vpop.f32.mrf.mxu0
    %1425 = vdwg.mxu0
    %1426 = vmatpush.bf16.msra.mxu0 %v1031
    %1427 = vmatpush.bf16.msra.mxu0 %v1027
    %1428 = vmatpush.bf16.msra.mxu0 %v1023
    %1429 = vmatpush.bf16.msra.mxu0 %v1019
    %1430 = vmatpush.bf16.msra.mxu0 %v1015
    %1431 = vmatpush.bf16.msra.mxu0 %v1011
    %1432 = vmatpush.bf16.msra.mxu0 %v1007
    %1433 = vmatpush.bf16.msra.mxu0 %v1003
    %1434 = vmatmul.bf16.gmra.mxu0 %v352
    %v1435 = vpop.f32.mrf.mxu0
    %v1436 = vadd.f32 %v1423, %v1435
    %v1437 = vpop.f32.mrf.mxu0
    %1438 = vdwg.mxu0
    %1439 = vmatpush.bf16.msra.mxu0 %v1063
    %1440 = vmatpush.bf16.msra.mxu0 %v1059
    %1441 = vmatpush.bf16.msra.mxu0 %v1055
    %1442 = vmatpush.bf16.msra.mxu0 %v1051
    %1443 = vmatpush.bf16.msra.mxu0 %v1047
    %1444 = vmatpush.bf16.msra.mxu0 %v1043
    %1445 = vmatpush.bf16.msra.mxu0 %v1039
    %1446 = vmatpush.bf16.msra.mxu0 %v1035
    %1447 = vmatmul.bf16.gmra.mxu0 %v353
    %v1448 = vpop.f32.mrf.mxu0
    %v1449 = vadd.f32 %v1436, %v1448
    %v1450 = vpop.f32.mrf.mxu0
    %1451 = vdwg.mxu0
    %1452 = vmatpush.bf16.msra.mxu0 %v1095
    %1453 = vmatpush.bf16.msra.mxu0 %v1091
    %1454 = vmatpush.bf16.msra.mxu0 %v1087
    %1455 = vmatpush.bf16.msra.mxu0 %v1083
    %1456 = vmatpush.bf16.msra.mxu0 %v1079
    %1457 = vmatpush.bf16.msra.mxu0 %v1075
    %1458 = vmatpush.bf16.msra.mxu0 %v1071
    %1459 = vmatpush.bf16.msra.mxu0 %v1067
    %1460 = vmatmul.bf16.gmra.mxu0 %v354
    %v1461 = vpop.f32.mrf.mxu0
    %v1462 = vadd.f32 %v1449, %v1461
    %v1463 = vpop.f32.mrf.mxu0
    %1464 = vdwg.mxu0
    %1465 = vmatpush.bf16.msra.mxu0 %v1127
    %1466 = vmatpush.bf16.msra.mxu0 %v1123
    %1467 = vmatpush.bf16.msra.mxu0 %v1119
    %1468 = vmatpush.bf16.msra.mxu0 %v1115
    %1469 = vmatpush.bf16.msra.mxu0 %v1111
    %1470 = vmatpush.bf16.msra.mxu0 %v1107
    %1471 = vmatpush.bf16.msra.mxu0 %v1103
    %1472 = vmatpush.bf16.msra.mxu0 %v1099
    %1473 = vmatmul.bf16.gmra.mxu0 %v355
    %v1474 = vpop.f32.mrf.mxu0
    %v1475 = vadd.f32 %v1462, %v1474
    %v1476 = vpop.f32.mrf.mxu0
    %1477 = vdwg.mxu0
    %1478 = vmatpush.bf16.msra.mxu0 %v968
    %1479 = vmatpush.bf16.msra.mxu0 %v964
    %1480 = vmatpush.bf16.msra.mxu0 %v960
    %1481 = vmatpush.bf16.msra.mxu0 %v956
    %1482 = vmatpush.bf16.msra.mxu0 %v952
    %1483 = vmatpush.bf16.msra.mxu0 %v948
    %1484 = vmatpush.bf16.msra.mxu0 %v944
    %1485 = vmatpush.bf16.msra.mxu0 %v940
    %1486 = vmatmul.bf16.gmra.mxu0 %v350
    %v1487 = vpop.f32.mrf.mxu0
    %v1488 = vadd.f32 %v335, %v1487
    %v1489 = vpop.f32.mrf.mxu0
    %1490 = vdwg.mxu0
    %1491 = vmatpush.bf16.msra.mxu0 %v1000
    %1492 = vmatpush.bf16.msra.mxu0 %v996
    %1493 = vmatpush.bf16.msra.mxu0 %v992
    %1494 = vmatpush.bf16.msra.mxu0 %v988
    %1495 = vmatpush.bf16.msra.mxu0 %v984
    %1496 = vmatpush.bf16.msra.mxu0 %v980
    %1497 = vmatpush.bf16.msra.mxu0 %v976
    %1498 = vmatpush.bf16.msra.mxu0 %v972
    %1499 = vmatmul.bf16.gmra.mxu0 %v351
    %v1500 = vpop.f32.mrf.mxu0
    %v1501 = vadd.f32 %v1488, %v1500
    %v1502 = vpop.f32.mrf.mxu0
    %1503 = vdwg.mxu0
    %1504 = vmatpush.bf16.msra.mxu0 %v1032
    %1505 = vmatpush.bf16.msra.mxu0 %v1028
    %1506 = vmatpush.bf16.msra.mxu0 %v1024
    %1507 = vmatpush.bf16.msra.mxu0 %v1020
    %1508 = vmatpush.bf16.msra.mxu0 %v1016
    %1509 = vmatpush.bf16.msra.mxu0 %v1012
    %1510 = vmatpush.bf16.msra.mxu0 %v1008
    %1511 = vmatpush.bf16.msra.mxu0 %v1004
    %1512 = vmatmul.bf16.gmra.mxu0 %v352
    %v1513 = vpop.f32.mrf.mxu0
    %v1514 = vadd.f32 %v1501, %v1513
    %v1515 = vpop.f32.mrf.mxu0
    %1516 = vdwg.mxu0
    %1517 = vmatpush.bf16.msra.mxu0 %v1064
    %1518 = vmatpush.bf16.msra.mxu0 %v1060
    %1519 = vmatpush.bf16.msra.mxu0 %v1056
    %1520 = vmatpush.bf16.msra.mxu0 %v1052
    %1521 = vmatpush.bf16.msra.mxu0 %v1048
    %1522 = vmatpush.bf16.msra.mxu0 %v1044
    %1523 = vmatpush.bf16.msra.mxu0 %v1040
    %1524 = vmatpush.bf16.msra.mxu0 %v1036
    %1525 = vmatmul.bf16.gmra.mxu0 %v353
    %v1526 = vpop.f32.mrf.mxu0
    %v1527 = vadd.f32 %v1514, %v1526
    %v1528 = vpop.f32.mrf.mxu0
    %1529 = vdwg.mxu0
    %1530 = vmatpush.bf16.msra.mxu0 %v1096
    %1531 = vmatpush.bf16.msra.mxu0 %v1092
    %1532 = vmatpush.bf16.msra.mxu0 %v1088
    %1533 = vmatpush.bf16.msra.mxu0 %v1084
    %1534 = vmatpush.bf16.msra.mxu0 %v1080
    %1535 = vmatpush.bf16.msra.mxu0 %v1076
    %1536 = vmatpush.bf16.msra.mxu0 %v1072
    %1537 = vmatpush.bf16.msra.mxu0 %v1068
    %1538 = vmatmul.bf16.gmra.mxu0 %v354
    %v1539 = vpop.f32.mrf.mxu0
    %v1540 = vadd.f32 %v1527, %v1539
    %v1541 = vpop.f32.mrf.mxu0
    %1542 = vdwg.mxu0
    %1543 = vmatpush.bf16.msra.mxu0 %v1128
    %1544 = vmatpush.bf16.msra.mxu0 %v1124
    %1545 = vmatpush.bf16.msra.mxu0 %v1120
    %1546 = vmatpush.bf16.msra.mxu0 %v1116
    %1547 = vmatpush.bf16.msra.mxu0 %v1112
    %1548 = vmatpush.bf16.msra.mxu0 %v1108
    %1549 = vmatpush.bf16.msra.mxu0 %v1104
    %1550 = vmatpush.bf16.msra.mxu0 %v1100
    %1551 = vmatmul.bf16.gmra.mxu0 %v355
    %v1552 = vpop.f32.mrf.mxu0
    %v1553 = vadd.f32 %v1540, %v1552
    %v1554 = vpop.f32.mrf.mxu0
    %1555 = vdwg.mxu0
    %1556 = vmatpush.bf16.msra.mxu0 %v969
    %1557 = vmatpush.bf16.msra.mxu0 %v965
    %1558 = vmatpush.bf16.msra.mxu0 %v961
    %1559 = vmatpush.bf16.msra.mxu0 %v957
    %1560 = vmatpush.bf16.msra.mxu0 %v953
    %1561 = vmatpush.bf16.msra.mxu0 %v949
    %1562 = vmatpush.bf16.msra.mxu0 %v945
    %1563 = vmatpush.bf16.msra.mxu0 %v941
    %1564 = vmatmul.bf16.gmra.mxu0 %v350
    %v1565 = vpop.f32.mrf.mxu0
    %v1566 = vadd.f32 %v336, %v1565
    %v1567 = vpop.f32.mrf.mxu0
    %1568 = vdwg.mxu0
    %1569 = vmatpush.bf16.msra.mxu0 %v1001
    %1570 = vmatpush.bf16.msra.mxu0 %v997
    %1571 = vmatpush.bf16.msra.mxu0 %v993
    %1572 = vmatpush.bf16.msra.mxu0 %v989
    %1573 = vmatpush.bf16.msra.mxu0 %v985
    %1574 = vmatpush.bf16.msra.mxu0 %v981
    %1575 = vmatpush.bf16.msra.mxu0 %v977
    %1576 = vmatpush.bf16.msra.mxu0 %v973
    %1577 = vmatmul.bf16.gmra.mxu0 %v351
    %v1578 = vpop.f32.mrf.mxu0
    %v1579 = vadd.f32 %v1566, %v1578
    %v1580 = vpop.f32.mrf.mxu0
    %1581 = vdwg.mxu0
    %1582 = vmatpush.bf16.msra.mxu0 %v1033
    %1583 = vmatpush.bf16.msra.mxu0 %v1029
    %1584 = vmatpush.bf16.msra.mxu0 %v1025
    %1585 = vmatpush.bf16.msra.mxu0 %v1021
    %1586 = vmatpush.bf16.msra.mxu0 %v1017
    %1587 = vmatpush.bf16.msra.mxu0 %v1013
    %1588 = vmatpush.bf16.msra.mxu0 %v1009
    %1589 = vmatpush.bf16.msra.mxu0 %v1005
    %1590 = vmatmul.bf16.gmra.mxu0 %v352
    %v1591 = vpop.f32.mrf.mxu0
    %v1592 = vadd.f32 %v1579, %v1591
    %v1593 = vpop.f32.mrf.mxu0
    %1594 = vdwg.mxu0
    %1595 = vmatpush.bf16.msra.mxu0 %v1065
    %1596 = vmatpush.bf16.msra.mxu0 %v1061
    %1597 = vmatpush.bf16.msra.mxu0 %v1057
    %1598 = vmatpush.bf16.msra.mxu0 %v1053
    %1599 = vmatpush.bf16.msra.mxu0 %v1049
    %1600 = vmatpush.bf16.msra.mxu0 %v1045
    %1601 = vmatpush.bf16.msra.mxu0 %v1041
    %1602 = vmatpush.bf16.msra.mxu0 %v1037
    %1603 = vmatmul.bf16.gmra.mxu0 %v353
    %v1604 = vpop.f32.mrf.mxu0
    %v1605 = vadd.f32 %v1592, %v1604
    %v1606 = vpop.f32.mrf.mxu0
    %1607 = vdwg.mxu0
    %1608 = vmatpush.bf16.msra.mxu0 %v1097
    %1609 = vmatpush.bf16.msra.mxu0 %v1093
    %1610 = vmatpush.bf16.msra.mxu0 %v1089
    %1611 = vmatpush.bf16.msra.mxu0 %v1085
    %1612 = vmatpush.bf16.msra.mxu0 %v1081
    %1613 = vmatpush.bf16.msra.mxu0 %v1077
    %1614 = vmatpush.bf16.msra.mxu0 %v1073
    %1615 = vmatpush.bf16.msra.mxu0 %v1069
    %1616 = vmatmul.bf16.gmra.mxu0 %v354
    %v1617 = vpop.f32.mrf.mxu0
    %v1618 = vadd.f32 %v1605, %v1617
    %v1619 = vpop.f32.mrf.mxu0
    %1620 = vdwg.mxu0
    %1621 = vmatpush.bf16.msra.mxu0 %v1129
    %1622 = vmatpush.bf16.msra.mxu0 %v1125
    %1623 = vmatpush.bf16.msra.mxu0 %v1121
    %1624 = vmatpush.bf16.msra.mxu0 %v1117
    %1625 = vmatpush.bf16.msra.mxu0 %v1113
    %1626 = vmatpush.bf16.msra.mxu0 %v1109
    %1627 = vmatpush.bf16.msra.mxu0 %v1105
    %1628 = vmatpush.bf16.msra.mxu0 %v1101
    %1629 = vmatmul.bf16.gmra.mxu0 %v355
    %v1630 = vpop.f32.mrf.mxu0
    %v1631 = vadd.f32 %v1618, %v1630
    %v1632 = vpop.f32.mrf.mxu0
    %1633 = vdwg.mxu0
    %v1634 = vmax.f32 %v1397, 0.0
    %v1635 = vmax.f32 %v1475, 0.0
    %v1636 = vmax.f32 %v1553, 0.0
    %v1637 = vmax.f32 %v1631, 0.0
    %v1638 = vpack.c.bf16 %v1634, %v1634
    %v1639 = vpack.c.bf16 %v1635, %v1635
    %v1640 = vpack.c.bf16 %v1636, %v1636
    %v1641 = vpack.c.bf16 %v1637, %v1637
    %v1642 = vld [vmem:[#allocation8] sm:$0xff]
    %v1643 = vld [vmem:[#allocation8 + $0x8] sm:$0xff]
    %v1644 = vld [vmem:[#allocation8 + $0x10] sm:$0xff]
    %v1645 = vld [vmem:[#allocation8 + $0x18] sm:$0xff]
    %v1646 = vld [vmem:[#allocation8 + $0x20] sm:$0xff]
    %v1647 = vld [vmem:[#allocation8 + $0x28] sm:$0xff]
    %v1648 = vld [vmem:[#allocation8 + $0x30] sm:$0xff]
    %v1649 = vld [vmem:[#allocation8 + $0x38] sm:$0xff]
    %v1650 = vld [vmem:[#allocation8 + $0x40] sm:$0xff]
    %v1651 = vld [vmem:[#allocation8 + $0x48] sm:$0xff]
    %v1652 = vld [vmem:[#allocation8 + $0x50] sm:$0xff]
    %v1653 = vld [vmem:[#allocation8 + $0x58] sm:$0xff]
    %v1654 = vld [vmem:[#allocation8 + $0x60] sm:$0xff]
    %v1655 = vld [vmem:[#allocation8 + $0x68] sm:$0xff]
    %v1656 = vld [vmem:[#allocation8 + $0x70] sm:$0xff]
    %v1657 = vld [vmem:[#allocation8 + $0x78] sm:$0xff]
    %v1658 = vld [vmem:[#allocation8 + $0x80] sm:$0xff]
    %v1659 = vld [vmem:[#allocation8 + $0x88] sm:$0xff]
    %v1660 = vld [vmem:[#allocation8 + $0x90] sm:$0xff]
    %v1661 = vld [vmem:[#allocation8 + $0x98] sm:$0xff]
    %v1662 = vld [vmem:[#allocation8 + $0xa0] sm:$0xff]
    %v1663 = vld [vmem:[#allocation8 + $0xa8] sm:$0xff]
    %v1664 = vld [vmem:[#allocation8 + $0xb0] sm:$0xff]
    %v1665 = vld [vmem:[#allocation8 + $0xb8] sm:$0xff]
    %v1666 = vld [vmem:[#allocation8 + $0xc0] sm:$0xff]
    %v1667 = vld [vmem:[#allocation8 + $0xc8] sm:$0xff]
    %v1668 = vld [vmem:[#allocation8 + $0xd0] sm:$0xff]
    %v1669 = vld [vmem:[#allocation8 + $0xd8] sm:$0xff]
    %v1670 = vld [vmem:[#allocation8 + $0xe0] sm:$0xff]
    %v1671 = vld [vmem:[#allocation8 + $0xe8] sm:$0xff]
    %v1672 = vld [vmem:[#allocation8 + $0xf0] sm:$0xff]
    %v1673 = vld [vmem:[#allocation8 + $0xf8] sm:$0xff]
    %v1674 = vld [vmem:[#allocation8 + $0x100] sm:$0xff]
    %v1675 = vld [vmem:[#allocation8 + $0x108] sm:$0xff]
    %v1676 = vld [vmem:[#allocation8 + $0x110] sm:$0xff]
    %v1677 = vld [vmem:[#allocation8 + $0x118] sm:$0xff]
    %v1678 = vld [vmem:[#allocation8 + $0x120] sm:$0xff]
    %v1679 = vld [vmem:[#allocation8 + $0x128] sm:$0xff]
    %v1680 = vld [vmem:[#allocation8 + $0x130] sm:$0xff]
    %v1681 = vld [vmem:[#allocation8 + $0x138] sm:$0xff]
    %v1682 = vld [vmem:[#allocation8 + $0x140] sm:$0xff]
    %v1683 = vld [vmem:[#allocation8 + $0x148] sm:$0xff]
    %v1684 = vld [vmem:[#allocation8 + $0x150] sm:$0xff]
    %v1685 = vld [vmem:[#allocation8 + $0x158] sm:$0xff]
    %v1686 = vld [vmem:[#allocation8 + $0x160] sm:$0xff]
    %v1687 = vld [vmem:[#allocation8 + $0x168] sm:$0xff]
    %v1688 = vld [vmem:[#allocation8 + $0x170] sm:$0xff]
    %v1689 = vld [vmem:[#allocation8 + $0x178] sm:$0xff]
    %v1690 = vld [vmem:[#allocation8 + $0x180] sm:$0xff]
    %v1691 = vld [vmem:[#allocation8 + $0x188] sm:$0xff]
    %v1692 = vld [vmem:[#allocation8 + $0x190] sm:$0xff]
    %v1693 = vld [vmem:[#allocation8 + $0x198] sm:$0xff]
    %v1694 = vld [vmem:[#allocation8 + $0x1a0] sm:$0xff]
    %v1695 = vld [vmem:[#allocation8 + $0x1a8] sm:$0xff]
    %v1696 = vld [vmem:[#allocation8 + $0x1b0] sm:$0xff]
    %v1697 = vld [vmem:[#allocation8 + $0x1b8] sm:$0xff]
    %v1698 = vld [vmem:[#allocation8 + $0x1c0] sm:$0xff]
    %v1699 = vld [vmem:[#allocation8 + $0x1c8] sm:$0xff]
    %v1700 = vld [vmem:[#allocation8 + $0x1d0] sm:$0xff]
    %v1701 = vld [vmem:[#allocation8 + $0x1d8] sm:$0xff]
    %v1702 = vld [vmem:[#allocation8 + $0x1e0] sm:$0xff]
    %v1703 = vld [vmem:[#allocation8 + $0x1e8] sm:$0xff]
    %v1704 = vld [vmem:[#allocation8 + $0x1f0] sm:$0xff]
    %v1705 = vld [vmem:[#allocation8 + $0x1f8] sm:$0xff]
    %v1706 = vld [vmem:[%s4] sm:$0x3]
    %v1708 = vperm.slane %v1706, 0
    %v1709 = vperm.slane %v1706, 1
    %v1776 = vunpack.c.l.b16 %v1642
    %v1777 = vunpack.c.h.b16 %v1642
    %v1778 = vunpack.c.l.b16 %v1643
    %v1779 = vunpack.c.h.b16 %v1643
    %v1780 = vunpack.c.l.b16 %v1644
    %v1781 = vunpack.c.h.b16 %v1644
    %v1782 = vunpack.c.l.b16 %v1645
    %v1783 = vunpack.c.h.b16 %v1645
    %v1784 = vunpack.c.l.b16 %v1646
    %v1785 = vunpack.c.h.b16 %v1646
    %v1786 = vunpack.c.l.b16 %v1647
    %v1787 = vunpack.c.h.b16 %v1647
    %v1788 = vunpack.c.l.b16 %v1648
    %v1789 = vunpack.c.h.b16 %v1648
    %v1790 = vunpack.c.l.b16 %v1649
    %v1791 = vunpack.c.h.b16 %v1649
    %v1792 = vunpack.c.l.b16 %v1650
    %v1793 = vunpack.c.h.b16 %v1650
    %v1794 = vunpack.c.l.b16 %v1651
    %v1795 = vunpack.c.h.b16 %v1651
    %v1796 = vunpack.c.l.b16 %v1652
    %v1797 = vunpack.c.h.b16 %v1652
    %v1798 = vunpack.c.l.b16 %v1653
    %v1799 = vunpack.c.h.b16 %v1653
    %v1800 = vunpack.c.l.b16 %v1654
    %v1801 = vunpack.c.h.b16 %v1654
    %v1802 = vunpack.c.l.b16 %v1655
    %v1803 = vunpack.c.h.b16 %v1655
    %v1804 = vunpack.c.l.b16 %v1656
    %v1805 = vunpack.c.h.b16 %v1656
    %v1806 = vunpack.c.l.b16 %v1657
    %v1807 = vunpack.c.h.b16 %v1657
    %v1808 = vunpack.c.l.b16 %v1658
    %v1809 = vunpack.c.h.b16 %v1658
    %v1810 = vunpack.c.l.b16 %v1659
    %v1811 = vunpack.c.h.b16 %v1659
    %v1812 = vunpack.c.l.b16 %v1660
    %v1813 = vunpack.c.h.b16 %v1660
    %v1814 = vunpack.c.l.b16 %v1661
    %v1815 = vunpack.c.h.b16 %v1661
    %v1816 = vunpack.c.l.b16 %v1662
    %v1817 = vunpack.c.h.b16 %v1662
    %v1818 = vunpack.c.l.b16 %v1663
    %v1819 = vunpack.c.h.b16 %v1663
    %v1820 = vunpack.c.l.b16 %v1664
    %v1821 = vunpack.c.h.b16 %v1664
    %v1822 = vunpack.c.l.b16 %v1665
    %v1823 = vunpack.c.h.b16 %v1665
    %v1824 = vunpack.c.l.b16 %v1666
    %v1825 = vunpack.c.h.b16 %v1666
    %v1826 = vunpack.c.l.b16 %v1667
    %v1827 = vunpack.c.h.b16 %v1667
    %v1828 = vunpack.c.l.b16 %v1668
    %v1829 = vunpack.c.h.b16 %v1668
    %v1830 = vunpack.c.l.b16 %v1669
    %v1831 = vunpack.c.h.b16 %v1669
    %v1832 = vunpack.c.l.b16 %v1670
    %v1833 = vunpack.c.h.b16 %v1670
    %v1834 = vunpack.c.l.b16 %v1671
    %v1835 = vunpack.c.h.b16 %v1671
    %v1836 = vunpack.c.l.b16 %v1672
    %v1837 = vunpack.c.h.b16 %v1672
    %v1838 = vunpack.c.l.b16 %v1673
    %v1839 = vunpack.c.h.b16 %v1673
    %v1840 = vunpack.c.l.b16 %v1674
    %v1841 = vunpack.c.h.b16 %v1674
    %v1842 = vunpack.c.l.b16 %v1675
    %v1843 = vunpack.c.h.b16 %v1675
    %v1844 = vunpack.c.l.b16 %v1676
    %v1845 = vunpack.c.h.b16 %v1676
    %v1846 = vunpack.c.l.b16 %v1677
    %v1847 = vunpack.c.h.b16 %v1677
    %v1848 = vunpack.c.l.b16 %v1678
    %v1849 = vunpack.c.h.b16 %v1678
    %v1850 = vunpack.c.l.b16 %v1679
    %v1851 = vunpack.c.h.b16 %v1679
    %v1852 = vunpack.c.l.b16 %v1680
    %v1853 = vunpack.c.h.b16 %v1680
    %v1854 = vunpack.c.l.b16 %v1681
    %v1855 = vunpack.c.h.b16 %v1681
    %v1856 = vunpack.c.l.b16 %v1682
    %v1857 = vunpack.c.h.b16 %v1682
    %v1858 = vunpack.c.l.b16 %v1683
    %v1859 = vunpack.c.h.b16 %v1683
    %v1860 = vunpack.c.l.b16 %v1684
    %v1861 = vunpack.c.h.b16 %v1684
    %v1862 = vunpack.c.l.b16 %v1685
    %v1863 = vunpack.c.h.b16 %v1685
    %v1864 = vunpack.c.l.b16 %v1686
    %v1865 = vunpack.c.h.b16 %v1686
    %v1866 = vunpack.c.l.b16 %v1687
    %v1867 = vunpack.c.h.b16 %v1687
    %v1868 = vunpack.c.l.b16 %v1688
    %v1869 = vunpack.c.h.b16 %v1688
    %v1870 = vunpack.c.l.b16 %v1689
    %v1871 = vunpack.c.h.b16 %v1689
    %v1872 = vunpack.c.l.b16 %v1690
    %v1873 = vunpack.c.h.b16 %v1690
    %v1874 = vunpack.c.l.b16 %v1691
    %v1875 = vunpack.c.h.b16 %v1691
    %v1876 = vunpack.c.l.b16 %v1692
    %v1877 = vunpack.c.h.b16 %v1692
    %v1878 = vunpack.c.l.b16 %v1693
    %v1879 = vunpack.c.h.b16 %v1693
    %v1880 = vunpack.c.l.b16 %v1694
    %v1881 = vunpack.c.h.b16 %v1694
    %v1882 = vunpack.c.l.b16 %v1695
    %v1883 = vunpack.c.h.b16 %v1695
    %v1884 = vunpack.c.l.b16 %v1696
    %v1885 = vunpack.c.h.b16 %v1696
    %v1886 = vunpack.c.l.b16 %v1697
    %v1887 = vunpack.c.h.b16 %v1697
    %v1888 = vunpack.c.l.b16 %v1698
    %v1889 = vunpack.c.h.b16 %v1698
    %v1890 = vunpack.c.l.b16 %v1699
    %v1891 = vunpack.c.h.b16 %v1699
    %v1892 = vunpack.c.l.b16 %v1700
    %v1893 = vunpack.c.h.b16 %v1700
    %v1894 = vunpack.c.l.b16 %v1701
    %v1895 = vunpack.c.h.b16 %v1701
    %v1896 = vunpack.c.l.b16 %v1702
    %v1897 = vunpack.c.h.b16 %v1702
    %v1898 = vunpack.c.l.b16 %v1703
    %v1899 = vunpack.c.h.b16 %v1703
    %v1900 = vunpack.c.l.b16 %v1704
    %v1901 = vunpack.c.h.b16 %v1704
    %v1902 = vunpack.c.l.b16 %v1705
    %v1903 = vunpack.c.h.b16 %v1705
    %v1904 = vpack.c.b16 %v1778, %v1776
    %v1905 = vpack.c.b16 %v1779, %v1777
    %v1906 = vpack.c.b16 %v1782, %v1780
    %v1907 = vpack.c.b16 %v1783, %v1781
    %v1908 = vpack.c.b16 %v1786, %v1784
    %v1909 = vpack.c.b16 %v1787, %v1785
    %v1910 = vpack.c.b16 %v1790, %v1788
    %v1911 = vpack.c.b16 %v1791, %v1789
    %v1912 = vpack.c.b16 %v1794, %v1792
    %v1913 = vpack.c.b16 %v1795, %v1793
    %v1914 = vpack.c.b16 %v1798, %v1796
    %v1915 = vpack.c.b16 %v1799, %v1797
    %v1916 = vpack.c.b16 %v1802, %v1800
    %v1917 = vpack.c.b16 %v1803, %v1801
    %v1918 = vpack.c.b16 %v1806, %v1804
    %v1919 = vpack.c.b16 %v1807, %v1805
    %v1920 = vpack.c.b16 %v1810, %v1808
    %v1921 = vpack.c.b16 %v1811, %v1809
    %v1922 = vpack.c.b16 %v1814, %v1812
    %v1923 = vpack.c.b16 %v1815, %v1813
    %v1924 = vpack.c.b16 %v1818, %v1816
    %v1925 = vpack.c.b16 %v1819, %v1817
    %v1926 = vpack.c.b16 %v1822, %v1820
    %v1927 = vpack.c.b16 %v1823, %v1821
    %v1928 = vpack.c.b16 %v1826, %v1824
    %v1929 = vpack.c.b16 %v1827, %v1825
    %v1930 = vpack.c.b16 %v1830, %v1828
    %v1931 = vpack.c.b16 %v1831, %v1829
    %v1932 = vpack.c.b16 %v1834, %v1832
    %v1933 = vpack.c.b16 %v1835, %v1833
    %v1934 = vpack.c.b16 %v1838, %v1836
    %v1935 = vpack.c.b16 %v1839, %v1837
    %v1936 = vpack.c.b16 %v1842, %v1840
    %v1937 = vpack.c.b16 %v1843, %v1841
    %v1938 = vpack.c.b16 %v1846, %v1844
    %v1939 = vpack.c.b16 %v1847, %v1845
    %v1940 = vpack.c.b16 %v1850, %v1848
    %v1941 = vpack.c.b16 %v1851, %v1849
    %v1942 = vpack.c.b16 %v1854, %v1852
    %v1943 = vpack.c.b16 %v1855, %v1853
    %v1944 = vpack.c.b16 %v1858, %v1856
    %v1945 = vpack.c.b16 %v1859, %v1857
    %v1946 = vpack.c.b16 %v1862, %v1860
    %v1947 = vpack.c.b16 %v1863, %v1861
    %v1948 = vpack.c.b16 %v1866, %v1864
    %v1949 = vpack.c.b16 %v1867, %v1865
    %v1950 = vpack.c.b16 %v1870, %v1868
    %v1951 = vpack.c.b16 %v1871, %v1869
    %v1952 = vpack.c.b16 %v1874, %v1872
    %v1953 = vpack.c.b16 %v1875, %v1873
    %v1954 = vpack.c.b16 %v1878, %v1876
    %v1955 = vpack.c.b16 %v1879, %v1877
    %v1956 = vpack.c.b16 %v1882, %v1880
    %v1957 = vpack.c.b16 %v1883, %v1881
    %v1958 = vpack.c.b16 %v1886, %v1884
    %v1959 = vpack.c.b16 %v1887, %v1885
    %v1960 = vpack.c.b16 %v1890, %v1888
    %v1961 = vpack.c.b16 %v1891, %v1889
    %v1962 = vpack.c.b16 %v1894, %v1892
    %v1963 = vpack.c.b16 %v1895, %v1893
    %v1964 = vpack.c.b16 %v1898, %v1896
    %v1965 = vpack.c.b16 %v1899, %v1897
    %v1966 = vpack.c.b16 %v1902, %v1900
    %v1967 = vpack.c.b16 %v1903, %v1901
    %2032 = vmatpush.bf16.msra.mxu0 %v1918
    %2033 = vmatpush.bf16.msra.mxu0 %v1916
    %2034 = vmatpush.bf16.msra.mxu0 %v1914
    %2035 = vmatpush.bf16.msra.mxu0 %v1912
    %2036 = vmatpush.bf16.msra.mxu0 %v1910
    %2037 = vmatpush.bf16.msra.mxu0 %v1908
    %2038 = vmatpush.bf16.msra.mxu0 %v1906
    %2039 = vmatpush.bf16.msra.mxu0 %v1904
    %2040 = vmatmul.bf16.gmra.mxu0 %v1638
    %v2041 = vpop.f32.mrf.mxu0
    %v2042 = vadd.f32 %v1708, %v2041
    %v2043 = vpop.f32.mrf.mxu0
    %2044 = vdwg.mxu0
    %2045 = vmatpush.bf16.msra.mxu0 %v1934
    %2046 = vmatpush.bf16.msra.mxu0 %v1932
    %2047 = vmatpush.bf16.msra.mxu0 %v1930
    %2048 = vmatpush.bf16.msra.mxu0 %v1928
    %2049 = vmatpush.bf16.msra.mxu0 %v1926
    %2050 = vmatpush.bf16.msra.mxu0 %v1924
    %2051 = vmatpush.bf16.msra.mxu0 %v1922
    %2052 = vmatpush.bf16.msra.mxu0 %v1920
    %2053 = vmatmul.bf16.gmra.mxu0 %v1639
    %v2054 = vpop.f32.mrf.mxu0
    %v2055 = vadd.f32 %v2042, %v2054
    %v2056 = vpop.f32.mrf.mxu0
    %2057 = vdwg.mxu0
    %2058 = vmatpush.bf16.msra.mxu0 %v1950
    %2059 = vmatpush.bf16.msra.mxu0 %v1948
    %2060 = vmatpush.bf16.msra.mxu0 %v1946
    %2061 = vmatpush.bf16.msra.mxu0 %v1944
    %2062 = vmatpush.bf16.msra.mxu0 %v1942
    %2063 = vmatpush.bf16.msra.mxu0 %v1940
    %2064 = vmatpush.bf16.msra.mxu0 %v1938
    %2065 = vmatpush.bf16.msra.mxu0 %v1936
    %2066 = vmatmul.bf16.gmra.mxu0 %v1640
    %v2067 = vpop.f32.mrf.mxu0
    %v2068 = vadd.f32 %v2055, %v2067
    %v2069 = vpop.f32.mrf.mxu0
    %2070 = vdwg.mxu0
    %2071 = vmatpush.bf16.msra.mxu0 %v1966
    %2072 = vmatpush.bf16.msra.mxu0 %v1964
    %2073 = vmatpush.bf16.msra.mxu0 %v1962
    %2074 = vmatpush.bf16.msra.mxu0 %v1960
    %2075 = vmatpush.bf16.msra.mxu0 %v1958
    %2076 = vmatpush.bf16.msra.mxu0 %v1956
    %2077 = vmatpush.bf16.msra.mxu0 %v1954
    %2078 = vmatpush.bf16.msra.mxu0 %v1952
    %2079 = vmatmul.bf16.gmra.mxu0 %v1641
    %v2080 = vpop.f32.mrf.mxu0
    %v2081 = vadd.f32 %v2068, %v2080
    %v2082 = vpop.f32.mrf.mxu0
    %2083 = vdwg.mxu0
    %2084 = vmatpush.bf16.msra.mxu0 %v1919
    %2085 = vmatpush.bf16.msra.mxu0 %v1917
    %2086 = vmatpush.bf16.msra.mxu0 %v1915
    %2087 = vmatpush.bf16.msra.mxu0 %v1913
    %2088 = vmatpush.bf16.msra.mxu0 %v1911
    %2089 = vmatpush.bf16.msra.mxu0 %v1909
    %2090 = vmatpush.bf16.msra.mxu0 %v1907
    %2091 = vmatpush.bf16.msra.mxu0 %v1905
    %2092 = vmatmul.bf16.gmra.mxu0 %v1638
    %v2093 = vpop.f32.mrf.mxu0
    %v2094 = vadd.f32 %v1709, %v2093
    %v2095 = vpop.f32.mrf.mxu0
    %2096 = vdwg.mxu0
    %2097 = vmatpush.bf16.msra.mxu0 %v1935
    %2098 = vmatpush.bf16.msra.mxu0 %v1933
    %2099 = vmatpush.bf16.msra.mxu0 %v1931
    %2100 = vmatpush.bf16.msra.mxu0 %v1929
    %2101 = vmatpush.bf16.msra.mxu0 %v1927
    %2102 = vmatpush.bf16.msra.mxu0 %v1925
    %2103 = vmatpush.bf16.msra.mxu0 %v1923
    %2104 = vmatpush.bf16.msra.mxu0 %v1921
    %2105 = vmatmul.bf16.gmra.mxu0 %v1639
    %v2106 = vpop.f32.mrf.mxu0
    %v2107 = vadd.f32 %v2094, %v2106
    %v2108 = vpop.f32.mrf.mxu0
    %2109 = vdwg.mxu0
    %2110 = vmatpush.bf16.msra.mxu0 %v1951
    %2111 = vmatpush.bf16.msra.mxu0 %v1949
    %2112 = vmatpush.bf16.msra.mxu0 %v1947
    %2113 = vmatpush.bf16.msra.mxu0 %v1945
    %2114 = vmatpush.bf16.msra.mxu0 %v1943
    %2115 = vmatpush.bf16.msra.mxu0 %v1941
    %2116 = vmatpush.bf16.msra.mxu0 %v1939
    %2117 = vmatpush.bf16.msra.mxu0 %v1937
    %2118 = vmatmul.bf16.gmra.mxu0 %v1640
    %v2119 = vpop.f32.mrf.mxu0
    %v2120 = vadd.f32 %v2107, %v2119
    %v2121 = vpop.f32.mrf.mxu0
    %2122 = vdwg.mxu0
    %2123 = vmatpush.bf16.msra.mxu0 %v1967
    %2124 = vmatpush.bf16.msra.mxu0 %v1965
    %2125 = vmatpush.bf16.msra.mxu0 %v1963
    %2126 = vmatpush.bf16.msra.mxu0 %v1961
    %2127 = vmatpush.bf16.msra.mxu0 %v1959
    %2128 = vmatpush.bf16.msra.mxu0 %v1957
    %2129 = vmatpush.bf16.msra.mxu0 %v1955
    %2130 = vmatpush.bf16.msra.mxu0 %v1953
    %2131 = vmatmul.bf16.gmra.mxu0 %v1641
    %v2132 = vpop.f32.mrf.mxu0
    %v2133 = vadd.f32 %v2120, %v2132
    %v2134 = vpop.f32.mrf.mxu0
    %2135 = vdwg.mxu0
    %v2136 = vmax.f32 %v2081, 0.0
    %v2137 = vmax.f32 %v2133, 0.0
    %v2138 = vpack.c.bf16 %v2136, %v2136
    %v2139 = vpack.c.bf16 %v2137, %v2137
    %v2140 = vld [vmem:[#allocation10] sm:$0xf]
    %v2141 = vld [vmem:[#allocation10 + $0x4] sm:$0xf]
    %v2142 = vld [vmem:[#allocation10 + $0x8] sm:$0xf]
    %v2143 = vld [vmem:[#allocation10 + $0xc] sm:$0xf]
    %v2144 = vld [vmem:[#allocation10 + $0x10] sm:$0xf]
    %v2145 = vld [vmem:[#allocation10 + $0x14] sm:$0xf]
    %v2146 = vld [vmem:[#allocation10 + $0x18] sm:$0xf]
    %v2147 = vld [vmem:[#allocation10 + $0x1c] sm:$0xf]
    %v2148 = vld [vmem:[#allocation10 + $0x20] sm:$0xf]
    %v2149 = vld [vmem:[#allocation10 + $0x24] sm:$0xf]
    %v2150 = vld [vmem:[#allocation10 + $0x28] sm:$0xf]
    %v2151 = vld [vmem:[#allocation10 + $0x2c] sm:$0xf]
    %v2152 = vld [vmem:[#allocation10 + $0x30] sm:$0xf]
    %v2153 = vld [vmem:[#allocation10 + $0x34] sm:$0xf]
    %v2154 = vld [vmem:[#allocation10 + $0x38] sm:$0xf]
    %v2155 = vld [vmem:[#allocation10 + $0x3c] sm:$0xf]
    %v2156 = vld [vmem:[#allocation10 + $0x40] sm:$0xf]
    %v2157 = vld [vmem:[#allocation10 + $0x44] sm:$0xf]
    %v2158 = vld [vmem:[#allocation10 + $0x48] sm:$0xf]
    %v2159 = vld [vmem:[#allocation10 + $0x4c] sm:$0xf]
    %v2160 = vld [vmem:[#allocation10 + $0x50] sm:$0xf]
    %v2161 = vld [vmem:[#allocation10 + $0x54] sm:$0xf]
    %v2162 = vld [vmem:[#allocation10 + $0x58] sm:$0xf]
    %v2163 = vld [vmem:[#allocation10 + $0x5c] sm:$0xf]
    %v2164 = vld [vmem:[#allocation10 + $0x60] sm:$0xf]
    %v2165 = vld [vmem:[#allocation10 + $0x64] sm:$0xf]
    %v2166 = vld [vmem:[#allocation10 + $0x68] sm:$0xf]
    %v2167 = vld [vmem:[#allocation10 + $0x6c] sm:$0xf]
    %v2168 = vld [vmem:[#allocation10 + $0x70] sm:$0xf]
    %v2169 = vld [vmem:[#allocation10 + $0x74] sm:$0xf]
    %v2170 = vld [vmem:[#allocation10 + $0x78] sm:$0xf]
    %v2171 = vld [vmem:[#allocation10 + $0x7c] sm:$0xf]
    %v2172 = vld [vmem:[%s6] sm:$0x1]
    %v2174 = vperm.slane %v2172, 0
    %v2208 = vunpack.c.l.b16 %v2140
    %v2209 = vunpack.c.l.b16 %v2141
    %v2210 = vunpack.c.l.b16 %v2142
    %v2211 = vunpack.c.l.b16 %v2143
    %v2212 = vunpack.c.l.b16 %v2144
    %v2213 = vunpack.c.l.b16 %v2145
    %v2214 = vunpack.c.l.b16 %v2146
    %v2215 = vunpack.c.l.b16 %v2147
    %v2216 = vunpack.c.l.b16 %v2148
    %v2217 = vunpack.c.l.b16 %v2149
    %v2218 = vunpack.c.l.b16 %v2150
    %v2219 = vunpack.c.l.b16 %v2151
    %v2220 = vunpack.c.l.b16 %v2152
    %v2221 = vunpack.c.l.b16 %v2153
    %v2222 = vunpack.c.l.b16 %v2154
    %v2223 = vunpack.c.l.b16 %v2155
    %v2224 = vunpack.c.l.b16 %v2156
    %v2225 = vunpack.c.l.b16 %v2157
    %v2226 = vunpack.c.l.b16 %v2158
    %v2227 = vunpack.c.l.b16 %v2159
    %v2228 = vunpack.c.l.b16 %v2160
    %v2229 = vunpack.c.l.b16 %v2161
    %v2230 = vunpack.c.l.b16 %v2162
    %v2231 = vunpack.c.l.b16 %v2163
    %v2232 = vunpack.c.l.b16 %v2164
    %v2233 = vunpack.c.l.b16 %v2165
    %v2234 = vunpack.c.l.b16 %v2166
    %v2235 = vunpack.c.l.b16 %v2167
    %v2236 = vunpack.c.l.b16 %v2168
    %v2237 = vunpack.c.l.b16 %v2169
    %v2238 = vunpack.c.l.b16 %v2170
    %v2239 = vunpack.c.l.b16 %v2171
    %v2240 = vpack.c.b16 %v2209, %v2208
    %v2241 = vpack.c.b16 %v2211, %v2210
    %v2242 = vpack.c.b16 %v2213, %v2212
    %v2243 = vpack.c.b16 %v2215, %v2214
    %v2244 = vpack.c.b16 %v2217, %v2216
    %v2245 = vpack.c.b16 %v2219, %v2218
    %v2246 = vpack.c.b16 %v2221, %v2220
    %v2247 = vpack.c.b16 %v2223, %v2222
    %v2248 = vpack.c.b16 %v2225, %v2224
    %v2249 = vpack.c.b16 %v2227, %v2226
    %v2250 = vpack.c.b16 %v2229, %v2228
    %v2251 = vpack.c.b16 %v2231, %v2230
    %v2252 = vpack.c.b16 %v2233, %v2232
    %v2253 = vpack.c.b16 %v2235, %v2234
    %v2254 = vpack.c.b16 %v2237, %v2236
    %v2255 = vpack.c.b16 %v2239, %v2238
    %2272 = vmatpush.bf16.msra.mxu0 %v2247
    %2273 = vmatpush.bf16.msra.mxu0 %v2246
    %2274 = vmatpush.bf16.msra.mxu0 %v2245
    %2275 = vmatpush.bf16.msra.mxu0 %v2244
    %2276 = vmatpush.bf16.msra.mxu0 %v2243
    %2277 = vmatpush.bf16.msra.mxu0 %v2242
    %2278 = vmatpush.bf16.msra.mxu0 %v2241
    %2279 = vmatpush.bf16.msra.mxu0 %v2240
    %2280 = vmatmul.bf16.gmra.mxu0 %v2138
    %v2281 = vpop.f32.mrf.mxu0
    %v2282 = vadd.f32 %v2174, %v2281
    %v2283 = vpop.f32.mrf.mxu0
    %2284 = vdwg.mxu0
    %2285 = vmatpush.bf16.msra.mxu0 %v2255
    %2286 = vmatpush.bf16.msra.mxu0 %v2254
    %2287 = vmatpush.bf16.msra.mxu0 %v2253
    %2288 = vmatpush.bf16.msra.mxu0 %v2252
    %2289 = vmatpush.bf16.msra.mxu0 %v2251
    %2290 = vmatpush.bf16.msra.mxu0 %v2250
    %2291 = vmatpush.bf16.msra.mxu0 %v2249
    %2292 = vmatpush.bf16.msra.mxu0 %v2248
    %2293 = vmatmul.bf16.gmra.mxu0 %v2139
    %v2294 = vpop.f32.mrf.mxu0
    %v2295 = vadd.f32 %v2282, %v2294
    %v2296 = vpop.f32.mrf.mxu0
    %2297 = vdwg.mxu0
    %v2298 = vmax.f32 %v2295, 0.0
    %v2299 = vpack.c.bf16 %v2298, %v2298
    %v2300 = vld [vmem:[#allocation11] sm:$0xff]
    %v2301 = vld [vmem:[#allocation11 + $0x8] sm:$0xff]
    %v2302 = vld [vmem:[#allocation11 + $0x10] sm:$0xff]
    %v2303 = vld [vmem:[#allocation11 + $0x18] sm:$0xff]
    %v2304 = vld [vmem:[#allocation11 + $0x20] sm:$0xf]
    %v2305 = vld [vmem:[#allocation11 + $0x24] sm:$0xff]
    %v2306 = vld [vmem:[#allocation11 + $0x2c] sm:$0xff]
    %v2307 = vld [vmem:[#allocation11 + $0x34] sm:$0xff]
    %v2308 = vld [vmem:[#allocation11 + $0x3c] sm:$0xff]
    %v2309 = vld [vmem:[#allocation11 + $0x44] sm:$0xf]
    %v2310 = vld [vmem:[#allocation11 + $0x48] sm:$0xff]
    %v2311 = vld [vmem:[#allocation11 + $0x50] sm:$0xff]
    %v2312 = vld [vmem:[#allocation11 + $0x58] sm:$0xff]
    %v2313 = vld [vmem:[#allocation11 + $0x60] sm:$0xff]
    %v2314 = vld [vmem:[#allocation11 + $0x68] sm:$0xf]
    %v2315 = vld [vmem:[#allocation11 + $0x6c] sm:$0xff]
    %v2316 = vld [vmem:[#allocation11 + $0x74] sm:$0xff]
    %v2317 = vld [vmem:[#allocation11 + $0x7c] sm:$0xff]
    %v2318 = vld [vmem:[#allocation11 + $0x84] sm:$0xff]
    %v2319 = vld [vmem:[#allocation11 + $0x8c] sm:$0xf]
    %v2320 = vld [vmem:[#allocation11 + $0x90] sm:$0xff]
    %v2321 = vld [vmem:[#allocation11 + $0x98] sm:$0xff]
    %v2322 = vld [vmem:[#allocation11 + $0xa0] sm:$0xff]
    %v2323 = vld [vmem:[#allocation11 + $0xa8] sm:$0xff]
    %v2324 = vld [vmem:[#allocation11 + $0xb0] sm:$0xf]
    %v2325 = vld [vmem:[#allocation11 + $0xb4] sm:$0xff]
    %v2326 = vld [vmem:[#allocation11 + $0xbc] sm:$0xff]
    %v2327 = vld [vmem:[#allocation11 + $0xc4] sm:$0xff]
    %v2328 = vld [vmem:[#allocation11 + $0xcc] sm:$0xff]
    %v2329 = vld [vmem:[#allocation11 + $0xd4] sm:$0xf]
    %v2330 = vld [vmem:[#allocation11 + $0xd8] sm:$0xff]
    %v2331 = vld [vmem:[#allocation11 + $0xe0] sm:$0xff]
    %v2332 = vld [vmem:[#allocation11 + $0xe8] sm:$0xff]
    %v2333 = vld [vmem:[#allocation11 + $0xf0] sm:$0xff]
    %v2334 = vld [vmem:[#allocation11 + $0xf8] sm:$0xf]
    %v2335 = vld [vmem:[#allocation11 + $0xfc] sm:$0xff]
    %v2336 = vld [vmem:[#allocation11 + $0x104] sm:$0xff]
    %v2337 = vld [vmem:[#allocation11 + $0x10c] sm:$0xff]
    %v2338 = vld [vmem:[#allocation11 + $0x114] sm:$0xff]
    %v2339 = vld [vmem:[#allocation11 + $0x11c] sm:$0xf]
    %v2340 = vld [vmem:[#allocation11 + $0x120] sm:$0xff]
    %v2341 = vld [vmem:[#allocation11 + $0x128] sm:$0xff]
    %v2342 = vld [vmem:[#allocation11 + $0x130] sm:$0xff]
    %v2343 = vld [vmem:[#allocation11 + $0x138] sm:$0xff]
    %v2344 = vld [vmem:[#allocation11 + $0x140] sm:$0xf]
    %v2345 = vld [vmem:[#allocation11 + $0x144] sm:$0xff]
    %v2346 = vld [vmem:[#allocation11 + $0x14c] sm:$0xff]
    %v2347 = vld [vmem:[#allocation11 + $0x154] sm:$0xff]
    %v2348 = vld [vmem:[#allocation11 + $0x15c] sm:$0xff]
    %v2349 = vld [vmem:[#allocation11 + $0x164] sm:$0xf]
    %v2350 = vld [vmem:[#allocation11 + $0x168] sm:$0xff]
    %v2351 = vld [vmem:[#allocation11 + $0x170] sm:$0xff]
    %v2352 = vld [vmem:[#allocation11 + $0x178] sm:$0xff]
    %v2353 = vld [vmem:[#allocation11 + $0x180] sm:$0xff]
    %v2354 = vld [vmem:[#allocation11 + $0x188] sm:$0xf]
    %v2355 = vld [vmem:[#allocation11 + $0x18c] sm:$0xff]
    %v2356 = vld [vmem:[#allocation11 + $0x194] sm:$0xff]
    %v2357 = vld [vmem:[#allocation11 + $0x19c] sm:$0xff]
    %v2358 = vld [vmem:[#allocation11 + $0x1a4] sm:$0xff]
    %v2359 = vld [vmem:[#allocation11 + $0x1ac] sm:$0xf]
    %v2360 = vld [vmem:[#allocation11 + $0x1b0] sm:$0xff]
    %v2361 = vld [vmem:[#allocation11 + $0x1b8] sm:$0xff]
    %v2362 = vld [vmem:[#allocation11 + $0x1c0] sm:$0xff]
    %v2363 = vld [vmem:[#allocation11 + $0x1c8] sm:$0xff]
    %v2364 = vld [vmem:[#allocation11 + $0x1d0] sm:$0xf]
    %v2365 = vld [vmem:[#allocation11 + $0x1d4] sm:$0xff]
    %v2366 = vld [vmem:[#allocation11 + $0x1dc] sm:$0xff]
    %v2367 = vld [vmem:[#allocation11 + $0x1e4] sm:$0xff]
    %v2368 = vld [vmem:[#allocation11 + $0x1ec] sm:$0xff]
    %v2369 = vld [vmem:[#allocation11 + $0x1f4] sm:$0xf]
    %v2370 = vld [vmem:[#allocation11 + $0x1f8] sm:$0xff]
    %v2371 = vld [vmem:[#allocation11 + $0x200] sm:$0xff]
    %v2372 = vld [vmem:[#allocation11 + $0x208] sm:$0xff]
    %v2373 = vld [vmem:[#allocation11 + $0x210] sm:$0xff]
    %v2374 = vld [vmem:[#allocation11 + $0x218] sm:$0xf]
    %v2375 = vld [vmem:[#allocation11 + $0x21c] sm:$0xff]
    %v2376 = vld [vmem:[#allocation11 + $0x224] sm:$0xff]
    %v2377 = vld [vmem:[#allocation11 + $0x22c] sm:$0xff]
    %v2378 = vld [vmem:[#allocation11 + $0x234] sm:$0xff]
    %v2379 = vld [vmem:[#allocation11 + $0x23c] sm:$0xf]
    %v2380 = vld [vmem:[#allocation13] sm:$0xff]
    %v2381 = vld [vmem:[#allocation13 + $0x8] sm:$0x1]
    %v2384 = vperm.slane %v2380, 0
    %v2385 = vperm.slane %v2380, 1
    %v2386 = vperm.slane %v2380, 2
    %v2387 = vperm.slane %v2380, 3
    %v2388 = vperm.slane %v2380, 4
    %v2389 = vperm.slane %v2380, 5
    %v2390 = vperm.slane %v2380, 6
    %v2391 = vperm.slane %v2380, 7
    %v2392 = vperm.slane %v2381, 0
    %v2482 = vunpack.c.l.b16 %v2300
    %v2483 = vunpack.c.h.b16 %v2300
    %v2484 = vunpack.c.l.b16 %v2301
    %v2485 = vunpack.c.h.b16 %v2301
    %v2486 = vunpack.c.l.b16 %v2302
    %v2487 = vunpack.c.h.b16 %v2302
    %v2488 = vunpack.c.l.b16 %v2303
    %v2489 = vunpack.c.h.b16 %v2303
    %v2490 = vunpack.c.l.b16 %v2304
    %v2491 = vunpack.c.l.b16 %v2305
    %v2492 = vunpack.c.h.b16 %v2305
    %v2493 = vunpack.c.l.b16 %v2306
    %v2494 = vunpack.c.h.b16 %v2306
    %v2495 = vunpack.c.l.b16 %v2307
    %v2496 = vunpack.c.h.b16 %v2307
    %v2497 = vunpack.c.l.b16 %v2308
    %v2498 = vunpack.c.h.b16 %v2308
    %v2499 = vunpack.c.l.b16 %v2309
    %v2500 = vunpack.c.l.b16 %v2310
    %v2501 = vunpack.c.h.b16 %v2310
    %v2502 = vunpack.c.l.b16 %v2311
    %v2503 = vunpack.c.h.b16 %v2311
    %v2504 = vunpack.c.l.b16 %v2312
    %v2505 = vunpack.c.h.b16 %v2312
    %v2506 = vunpack.c.l.b16 %v2313
    %v2507 = vunpack.c.h.b16 %v2313
    %v2508 = vunpack.c.l.b16 %v2314
    %v2509 = vunpack.c.l.b16 %v2315
    %v2510 = vunpack.c.h.b16 %v2315
    %v2511 = vunpack.c.l.b16 %v2316
    %v2512 = vunpack.c.h.b16 %v2316
    %v2513 = vunpack.c.l.b16 %v2317
    %v2514 = vunpack.c.h.b16 %v2317
    %v2515 = vunpack.c.l.b16 %v2318
    %v2516 = vunpack.c.h.b16 %v2318
    %v2517 = vunpack.c.l.b16 %v2319
    %v2518 = vunpack.c.l.b16 %v2320
    %v2519 = vunpack.c.h.b16 %v2320
    %v2520 = vunpack.c.l.b16 %v2321
    %v2521 = vunpack.c.h.b16 %v2321
    %v2522 = vunpack.c.l.b16 %v2322
    %v2523 = vunpack.c.h.b16 %v2322
    %v2524 = vunpack.c.l.b16 %v2323
    %v2525 = vunpack.c.h.b16 %v2323
    %v2526 = vunpack.c.l.b16 %v2324
    %v2527 = vunpack.c.l.b16 %v2325
    %v2528 = vunpack.c.h.b16 %v2325
    %v2529 = vunpack.c.l.b16 %v2326
    %v2530 = vunpack.c.h.b16 %v2326
    %v2531 = vunpack.c.l.b16 %v2327
    %v2532 = vunpack.c.h.b16 %v2327
    %v2533 = vunpack.c.l.b16 %v2328
    %v2534 = vunpack.c.h.b16 %v2328
    %v2535 = vunpack.c.l.b16 %v2329
    %v2536 = vunpack.c.l.b16 %v2330
    %v2537 = vunpack.c.h.b16 %v2330
    %v2538 = vunpack.c.l.b16 %v2331
    %v2539 = vunpack.c.h.b16 %v2331
    %v2540 = vunpack.c.l.b16 %v2332
    %v2541 = vunpack.c.h.b16 %v2332
    %v2542 = vunpack.c.l.b16 %v2333
    %v2543 = vunpack.c.h.b16 %v2333
    %v2544 = vunpack.c.l.b16 %v2334
    %v2545 = vunpack.c.l.b16 %v2335
    %v2546 = vunpack.c.h.b16 %v2335
    %v2547 = vunpack.c.l.b16 %v2336
    %v2548 = vunpack.c.h.b16 %v2336
    %v2549 = vunpack.c.l.b16 %v2337
    %v2550 = vunpack.c.h.b16 %v2337
    %v2551 = vunpack.c.l.b16 %v2338
    %v2552 = vunpack.c.h.b16 %v2338
    %v2553 = vunpack.c.l.b16 %v2339
    %v2554 = vunpack.c.l.b16 %v2340
    %v2555 = vunpack.c.h.b16 %v2340
    %v2556 = vunpack.c.l.b16 %v2341
    %v2557 = vunpack.c.h.b16 %v2341
    %v2558 = vunpack.c.l.b16 %v2342
    %v2559 = vunpack.c.h.b16 %v2342
    %v2560 = vunpack.c.l.b16 %v2343
    %v2561 = vunpack.c.h.b16 %v2343
    %v2562 = vunpack.c.l.b16 %v2344
    %v2563 = vunpack.c.l.b16 %v2345
    %v2564 = vunpack.c.h.b16 %v2345
    %v2565 = vunpack.c.l.b16 %v2346
    %v2566 = vunpack.c.h.b16 %v2346
    %v2567 = vunpack.c.l.b16 %v2347
    %v2568 = vunpack.c.h.b16 %v2347
    %v2569 = vunpack.c.l.b16 %v2348
    %v2570 = vunpack.c.h.b16 %v2348
    %v2571 = vunpack.c.l.b16 %v2349
    %v2572 = vunpack.c.l.b16 %v2350
    %v2573 = vunpack.c.h.b16 %v2350
    %v2574 = vunpack.c.l.b16 %v2351
    %v2575 = vunpack.c.h.b16 %v2351
    %v2576 = vunpack.c.l.b16 %v2352
    %v2577 = vunpack.c.h.b16 %v2352
    %v2578 = vunpack.c.l.b16 %v2353
    %v2579 = vunpack.c.h.b16 %v2353
    %v2580 = vunpack.c.l.b16 %v2354
    %v2581 = vunpack.c.l.b16 %v2355
    %v2582 = vunpack.c.h.b16 %v2355
    %v2583 = vunpack.c.l.b16 %v2356
    %v2584 = vunpack.c.h.b16 %v2356
    %v2585 = vunpack.c.l.b16 %v2357
    %v2586 = vunpack.c.h.b16 %v2357
    %v2587 = vunpack.c.l.b16 %v2358
    %v2588 = vunpack.c.h.b16 %v2358
    %v2589 = vunpack.c.l.b16 %v2359
    %v2590 = vunpack.c.l.b16 %v2360
    %v2591 = vunpack.c.h.b16 %v2360
    %v2592 = vunpack.c.l.b16 %v2361
    %v2593 = vunpack.c.h.b16 %v2361
    %v2594 = vunpack.c.l.b16 %v2362
    %v2595 = vunpack.c.h.b16 %v2362
    %v2596 = vunpack.c.l.b16 %v2363
    %v2597 = vunpack.c.h.b16 %v2363
    %v2598 = vunpack.c.l.b16 %v2364
    %v2599 = vunpack.c.l.b16 %v2365
    %v2600 = vunpack.c.h.b16 %v2365
    %v2601 = vunpack.c.l.b16 %v2366
    %v2602 = vunpack.c.h.b16 %v2366
    %v2603 = vunpack.c.l.b16 %v2367
    %v2604 = vunpack.c.h.b16 %v2367
    %v2605 = vunpack.c.l.b16 %v2368
    %v2606 = vunpack.c.h.b16 %v2368
    %v2607 = vunpack.c.l.b16 %v2369
    %v2608 = vunpack.c.l.b16 %v2370
    %v2609 = vunpack.c.h.b16 %v2370
    %v2610 = vunpack.c.l.b16 %v2371
    %v2611 = vunpack.c.h.b16 %v2371
    %v2612 = vunpack.c.l.b16 %v2372
    %v2613 = vunpack.c.h.b16 %v2372
    %v2614 = vunpack.c.l.b16 %v2373
    %v2615 = vunpack.c.h.b16 %v2373
    %v2616 = vunpack.c.l.b16 %v2374
    %v2617 = vunpack.c.l.b16 %v2375
    %v2618 = vunpack.c.h.b16 %v2375
    %v2619 = vunpack.c.l.b16 %v2376
    %v2620 = vunpack.c.h.b16 %v2376
    %v2621 = vunpack.c.l.b16 %v2377
    %v2622 = vunpack.c.h.b16 %v2377
    %v2623 = vunpack.c.l.b16 %v2378
    %v2624 = vunpack.c.h.b16 %v2378
    %v2625 = vunpack.c.l.b16 %v2379
    %v2626 = vpack.c.b16 %v2491, %v2482
    %v2627 = vpack.c.b16 %v2492, %v2483
    %v2628 = vpack.c.b16 %v2493, %v2484
    %v2629 = vpack.c.b16 %v2494, %v2485
    %v2630 = vpack.c.b16 %v2495, %v2486
    %v2631 = vpack.c.b16 %v2496, %v2487
    %v2632 = vpack.c.b16 %v2497, %v2488
    %v2633 = vpack.c.b16 %v2498, %v2489
    %v2634 = vpack.c.b16 %v2499, %v2490
    %v2635 = vpack.c.b16 %v2509, %v2500
    %v2636 = vpack.c.b16 %v2510, %v2501
    %v2637 = vpack.c.b16 %v2511, %v2502
    %v2638 = vpack.c.b16 %v2512, %v2503
    %v2639 = vpack.c.b16 %v2513, %v2504
    %v2640 = vpack.c.b16 %v2514, %v2505
    %v2641 = vpack.c.b16 %v2515, %v2506
    %v2642 = vpack.c.b16 %v2516, %v2507
    %v2643 = vpack.c.b16 %v2517, %v2508
    %v2644 = vpack.c.b16 %v2527, %v2518
    %v2645 = vpack.c.b16 %v2528, %v2519
    %v2646 = vpack.c.b16 %v2529, %v2520
    %v2647 = vpack.c.b16 %v2530, %v2521
    %v2648 = vpack.c.b16 %v2531, %v2522
    %v2649 = vpack.c.b16 %v2532, %v2523
    %v2650 = vpack.c.b16 %v2533, %v2524
    %v2651 = vpack.c.b16 %v2534, %v2525
    %v2652 = vpack.c.b16 %v2535, %v2526
    %v2653 = vpack.c.b16 %v2545, %v2536
    %v2654 = vpack.c.b16 %v2546, %v2537
    %v2655 = vpack.c.b16 %v2547, %v2538
    %v2656 = vpack.c.b16 %v2548, %v2539
    %v2657 = vpack.c.b16 %v2549, %v2540
    %v2658 = vpack.c.b16 %v2550, %v2541
    %v2659 = vpack.c.b16 %v2551, %v2542
    %v2660 = vpack.c.b16 %v2552, %v2543
    %v2661 = vpack.c.b16 %v2553, %v2544
    %v2662 = vpack.c.b16 %v2563, %v2554
    %v2663 = vpack.c.b16 %v2564, %v2555
    %v2664 = vpack.c.b16 %v2565, %v2556
    %v2665 = vpack.c.b16 %v2566, %v2557
    %v2666 = vpack.c.b16 %v2567, %v2558
    %v2667 = vpack.c.b16 %v2568, %v2559
    %v2668 = vpack.c.b16 %v2569, %v2560
    %v2669 = vpack.c.b16 %v2570, %v2561
    %v2670 = vpack.c.b16 %v2571, %v2562
    %v2671 = vpack.c.b16 %v2581, %v2572
    %v2672 = vpack.c.b16 %v2582, %v2573
    %v2673 = vpack.c.b16 %v2583, %v2574
    %v2674 = vpack.c.b16 %v2584, %v2575
    %v2675 = vpack.c.b16 %v2585, %v2576
    %v2676 = vpack.c.b16 %v2586, %v2577
    %v2677 = vpack.c.b16 %v2587, %v2578
    %v2678 = vpack.c.b16 %v2588, %v2579
    %v2679 = vpack.c.b16 %v2589, %v2580
    %v2680 = vpack.c.b16 %v2599, %v2590
    %v2681 = vpack.c.b16 %v2600, %v2591
    %v2682 = vpack.c.b16 %v2601, %v2592
    %v2683 = vpack.c.b16 %v2602, %v2593
    %v2684 = vpack.c.b16 %v2603, %v2594
    %v2685 = vpack.c.b16 %v2604, %v2595
    %v2686 = vpack.c.b16 %v2605, %v2596
    %v2687 = vpack.c.b16 %v2606, %v2597
    %v2688 = vpack.c.b16 %v2607, %v2598
    %v2689 = vpack.c.b16 %v2617, %v2608
    %v2690 = vpack.c.b16 %v2618, %v2609
    %v2691 = vpack.c.b16 %v2619, %v2610
    %v2692 = vpack.c.b16 %v2620, %v2611
    %v2693 = vpack.c.b16 %v2621, %v2612
    %v2694 = vpack.c.b16 %v2622, %v2613
    %v2695 = vpack.c.b16 %v2623, %v2614
    %v2696 = vpack.c.b16 %v2624, %v2615
    %v2697 = vpack.c.b16 %v2625, %v2616
    %2770 = vmatpush.bf16.msra.mxu0 %v2689
    %2771 = vmatpush.bf16.msra.mxu0 %v2680
    %2772 = vmatpush.bf16.msra.mxu0 %v2671
    %2773 = vmatpush.bf16.msra.mxu0 %v2662
    %2774 = vmatpush.bf16.msra.mxu0 %v2653
    %2775 = vmatpush.bf16.msra.mxu0 %v2644
    %2776 = vmatpush.bf16.msra.mxu0 %v2635
    %2777 = vmatpush.bf16.msra.mxu0 %v2626
    %2778 = vmatmul.bf16.gmra.mxu0 %v2299
    %v2779 = vpop.f32.mrf.mxu0
    %v2780 = vadd.f32 %v2384, %v2779
    %v2781 = vpop.f32.mrf.mxu0
    %2782 = vdwg.mxu0
    %2783 = vmatpush.bf16.msra.mxu0 %v2690
    %2784 = vmatpush.bf16.msra.mxu0 %v2681
    %2785 = vmatpush.bf16.msra.mxu0 %v2672
    %2786 = vmatpush.bf16.msra.mxu0 %v2663
    %2787 = vmatpush.bf16.msra.mxu0 %v2654
    %2788 = vmatpush.bf16.msra.mxu0 %v2645
    %2789 = vmatpush.bf16.msra.mxu0 %v2636
    %2790 = vmatpush.bf16.msra.mxu0 %v2627
    %2791 = vmatmul.bf16.gmra.mxu0 %v2299
    %v2792 = vpop.f32.mrf.mxu0
    %v2793 = vadd.f32 %v2385, %v2792
    %v2794 = vpop.f32.mrf.mxu0
    %2795 = vdwg.mxu0
    %2796 = vmatpush.bf16.msra.mxu0 %v2691
    %2797 = vmatpush.bf16.msra.mxu0 %v2682
    %2798 = vmatpush.bf16.msra.mxu0 %v2673
    %2799 = vmatpush.bf16.msra.mxu0 %v2664
    %2800 = vmatpush.bf16.msra.mxu0 %v2655
    %2801 = vmatpush.bf16.msra.mxu0 %v2646
    %2802 = vmatpush.bf16.msra.mxu0 %v2637
    %2803 = vmatpush.bf16.msra.mxu0 %v2628
    %2804 = vmatmul.bf16.gmra.mxu0 %v2299
    %v2805 = vpop.f32.mrf.mxu0
    %v2806 = vadd.f32 %v2386, %v2805
    %v2807 = vpop.f32.mrf.mxu0
    %2808 = vdwg.mxu0
    %2809 = vmatpush.bf16.msra.mxu0 %v2692
    %2810 = vmatpush.bf16.msra.mxu0 %v2683
    %2811 = vmatpush.bf16.msra.mxu0 %v2674
    %2812 = vmatpush.bf16.msra.mxu0 %v2665
    %2813 = vmatpush.bf16.msra.mxu0 %v2656
    %2814 = vmatpush.bf16.msra.mxu0 %v2647
    %2815 = vmatpush.bf16.msra.mxu0 %v2638
    %2816 = vmatpush.bf16.msra.mxu0 %v2629
    %2817 = vmatmul.bf16.gmra.mxu0 %v2299
    %v2818 = vpop.f32.mrf.mxu0
    %v2819 = vadd.f32 %v2387, %v2818
    %v2820 = vpop.f32.mrf.mxu0
    %2821 = vdwg.mxu0
    %2822 = vmatpush.bf16.msra.mxu0 %v2693
    %2823 = vmatpush.bf16.msra.mxu0 %v2684
    %2824 = vmatpush.bf16.msra.mxu0 %v2675
    %2825 = vmatpush.bf16.msra.mxu0 %v2666
    %2826 = vmatpush.bf16.msra.mxu0 %v2657
    %2827 = vmatpush.bf16.msra.mxu0 %v2648
    %2828 = vmatpush.bf16.msra.mxu0 %v2639
    %2829 = vmatpush.bf16.msra.mxu0 %v2630
    %2830 = vmatmul.bf16.gmra.mxu0 %v2299
    %v2831 = vpop.f32.mrf.mxu0
    %v2832 = vadd.f32 %v2388, %v2831
    %v2833 = vpop.f32.mrf.mxu0
    %2834 = vdwg.mxu0
    %2835 = vmatpush.bf16.msra.mxu0 %v2694
    %2836 = vmatpush.bf16.msra.mxu0 %v2685
    %2837 = vmatpush.bf16.msra.mxu0 %v2676
    %2838 = vmatpush.bf16.msra.mxu0 %v2667
    %2839 = vmatpush.bf16.msra.mxu0 %v2658
    %2840 = vmatpush.bf16.msra.mxu0 %v2649
    %2841 = vmatpush.bf16.msra.mxu0 %v2640
    %2842 = vmatpush.bf16.msra.mxu0 %v2631
    %2843 = vmatmul.bf16.gmra.mxu0 %v2299
    %v2844 = vpop.f32.mrf.mxu0
    %v2845 = vadd.f32 %v2389, %v2844
    %v2846 = vpop.f32.mrf.mxu0
    %2847 = vdwg.mxu0
    %2848 = vmatpush.bf16.msra.mxu0 %v2695
    %2849 = vmatpush.bf16.msra.mxu0 %v2686
    %2850 = vmatpush.bf16.msra.mxu0 %v2677
    %2851 = vmatpush.bf16.msra.mxu0 %v2668
    %2852 = vmatpush.bf16.msra.mxu0 %v2659
    %2853 = vmatpush.bf16.msra.mxu0 %v2650
    %2854 = vmatpush.bf16.msra.mxu0 %v2641
    %2855 = vmatpush.bf16.msra.mxu0 %v2632
    %2856 = vmatmul.bf16.gmra.mxu0 %v2299
    %v2857 = vpop.f32.mrf.mxu0
    %v2858 = vadd.f32 %v2390, %v2857
    %v2859 = vpop.f32.mrf.mxu0
    %2860 = vdwg.mxu0
    %2861 = vmatpush.bf16.msra.mxu0 %v2696
    %2862 = vmatpush.bf16.msra.mxu0 %v2687
    %2863 = vmatpush.bf16.msra.mxu0 %v2678
    %2864 = vmatpush.bf16.msra.mxu0 %v2669
    %2865 = vmatpush.bf16.msra.mxu0 %v2660
    %2866 = vmatpush.bf16.msra.mxu0 %v2651
    %2867 = vmatpush.bf16.msra.mxu0 %v2642
    %2868 = vmatpush.bf16.msra.mxu0 %v2633
    %2869 = vmatmul.bf16.gmra.mxu0 %v2299
    %v2870 = vpop.f32.mrf.mxu0
    %v2871 = vadd.f32 %v2391, %v2870
    %v2872 = vpop.f32.mrf.mxu0
    %2873 = vdwg.mxu0
    %2874 = vmatpush.bf16.msra.mxu0 %v2697
    %2875 = vmatpush.bf16.msra.mxu0 %v2688
    %2876 = vmatpush.bf16.msra.mxu0 %v2679
    %2877 = vmatpush.bf16.msra.mxu0 %v2670
    %2878 = vmatpush.bf16.msra.mxu0 %v2661
    %2879 = vmatpush.bf16.msra.mxu0 %v2652
    %2880 = vmatpush.bf16.msra.mxu0 %v2643
    %2881 = vmatpush.bf16.msra.mxu0 %v2634
    %2882 = vmatmul.bf16.gmra.mxu0 %v2299
    %v2883 = vpop.f32.mrf.mxu0
    %v2884 = vadd.f32 %v2392, %v2883
    %v2885 = vpop.f32.mrf.mxu0
    %2886 = vdwg.mxu0
    %2887 = vst [vmem:[#allocation14] sm:$0xff] %v2780
    %2888 = vst [vmem:[#allocation14 + $0x8] sm:$0xff] %v2793
    %2889 = vst [vmem:[#allocation14 + $0x10] sm:$0xff] %v2806
    %2890 = vst [vmem:[#allocation14 + $0x18] sm:$0xff] %v2819
    %2891 = vst [vmem:[#allocation14 + $0x20] sm:$0xff] %v2832
    %2892 = vst [vmem:[#allocation14 + $0x28] sm:$0xff] %v2845
    %2893 = vst [vmem:[#allocation14 + $0x30] sm:$0xff] %v2858
    %2894 = vst [vmem:[#allocation14 + $0x38] sm:$0xff] %v2871
    %2895 = vst [vmem:[#allocation14 + $0x40] sm:$0xff] %v2884
    // Predicated region
    $region66: #{tpu_custom_call.1} parent=1 // pred_check
      _
    $region67: #{tpu_custom_call.1} parent=1 // pred_check_branch
      %2897 = sbr.rel (0) target = $region69
    $region68: #{tpu_custom_call.1} parent=1 // pred_region
      %2899 = vsyncadd [#allocation4], 0
      %s2901 = sshll.u32 [#allocation14], 4
      %s2902 = int_to_ptr.vmem [resolvable:$true] %s2901
      %s2903 = sshll.u32 %s9, 4
      %s2904 = int_to_ptr.hbm [resolvable:$true] %s2903
      %2906 = dma.vmem_to_hbm [thread:$0]  %s2902, 1152, %s2904, [#allocation4]
    $region69: #{tpu_custom_call.1} parent=1 // pred_fallthru
      _
    // Predicated region
    $region70: #{tpu_custom_call.1} parent=1 // pred_check
      _
    $region71: #{tpu_custom_call.1} parent=1 // pred_check_branch
      %2908 = sbr.rel (0) target = $region73
    $region72: #{tpu_custom_call.1} parent=1 // pred_region
      %2910 = dma.done [#allocation4], 1152
    $region73: #{tpu_custom_call.1} parent=1 // pred_fallthru
      _
    %2911 = vsyncpa [#allocation3], 1
    %2912 = vsyncpa [#allocation6], 1
    %2913 = vsyncpa [#allocation9], 1
    %2914 = vsyncpa [#allocation12], 1
    %2915 = vsyncpa [#allocation4], 1

</llo_original>
